<compile_context>
chip_gen: v6e
topology: v6e:2x2x1
jax: 0.10.0
libtpu: 0.0.40
codegen_flags: <defaults>
</compile_context>

<pallas_src>
import jax
import jax.numpy as jnp
from jax.experimental import pallas as pl
from jax.experimental.pallas import tpu as pltpu

EPS = 1e-5
K = 9     # conv kernel width (1, 9)
PAD = 4   # conv width padding (0, 4)


# ---------------------------------------------------------------------------
# In-kernel helpers
# ---------------------------------------------------------------------------
def _dot(w, cols):
    """MXU matmul with f32 accumulation; exact f32 math when operands are f32."""
    prec = (jax.lax.Precision.HIGHEST if w.dtype == jnp.float32
            else jax.lax.Precision.DEFAULT)
    return jnp.dot(w, cols, preferred_element_type=jnp.float32, precision=prec)


def _shifted_tap(v, d, mrow):
    """out[:, p] = v[:, p + d], masked by mrow; wrapped lanes are masked to 0."""
    tp = v.shape[-1]
    if tp % 128 == 0:
        sh = pltpu.roll(v, (-d) % tp, axis=1)      # XLU lane rotate (free slot)
    else:
        # Fallback single-tile path with a non-128-aligned lane width.
        z = jnp.zeros((v.shape[0], abs(d)), v.dtype)
        sh = (jnp.concatenate([v[:, d:], z], axis=1) if d > 0
              else jnp.concatenate([z, v[:, :tp + d]], axis=1))
    return sh * mrow


def _tap_cols(a, m):
    """Build the (K*C, TP) folded-tap operand of a (1,9) conv from (C, TP) f32.

    The per-tap mask rows encode the (0,4) zero padding; C is a multiple of 8
    so the sublane concatenation stays tile-aligned for f32."""
    pieces = []
    for k in range(K):
        d = k - PAD
        pieces.append(a if d == 0 else _shifted_tap(a, d, m[k:k + 1, :]))
    return jnp.concatenate(pieces, axis=0)


def _conv2_pre(h1_ref, p1_ref, w2_ref, m_ref):
    """relu(BN1(conv1)) -> folded-tap conv2 matmul; returns pre-BN2 (Cout, TP) f32."""
    p1 = p1_ref[...]
    a = jnp.maximum(h1_ref[...].astype(jnp.float32) * p1[:, 0:1] + p1[:, 1:2], 0.0)
    cols = _tap_cols(a, m_ref[...]).astype(w2_ref.dtype)
    return _dot(w2_ref[...], cols)


# ---------------------------------------------------------------------------
# Pass 1: conv1 + fused 1x1 shortcut (one matmul) + per-tile BN statistics
# ---------------------------------------------------------------------------
def _conv1_roll_kernel(x_ref, w_ref, m_ref, h1_ref, hsc_ref, s_ref, q_ref):
    # stride == 1: build the 9-tap stack in-kernel from a (Cin8, TP) block.
    cout = h1_ref.shape[0]
    xf = x_ref[...].astype(jnp.float32)
    cols = _tap_cols(xf, m_ref[...]).astype(w_ref.dtype)
    z = _dot(w_ref[...], cols)                       # (2*Cout, TP) f32
    h1_ref[...] = z[:cout].astype(h1_ref.dtype)      # conv1, pre-BN
    hsc_ref[...] = z[cout:].astype(hsc_ref.dtype)    # 1x1 shortcut, pre-BN
    s_ref[0, :, :] = jnp.sum(z, axis=1, keepdims=True)
    q_ref[0, :, :] = jnp.sum(z * z, axis=1, keepdims=True)


def _conv1_col_kernel(xcol_ref, w_ref, h1_ref, hsc_ref, s_ref, q_ref):
    # stride > 1: wrapper-built im2col holding only the strided output positions.
    cout = h1_ref.shape[0]
    z = _dot(w_ref[...], xcol_ref[...])
    h1_ref[...] = z[:cout].astype(h1_ref.dtype)
    hsc_ref[...] = z[cout:].astype(hsc_ref.dtype)
    s_ref[0, :, :] = jnp.sum(z, axis=1, keepdims=True)
    q_ref[0, :, :] = jnp.sum(z * z, axis=1, keepdims=True)


# ---------------------------------------------------------------------------
# Pass 2: BN1 + ReLU + conv2, statistics only (no y2 HBM round-trip)
# ---------------------------------------------------------------------------
def _conv2_stats_kernel(h1_ref, p1_ref, w2_ref, m_ref, s_ref, q_ref):
    z = _conv2_pre(h1_ref, p1_ref, w2_ref, m_ref)
    s_ref[0, :, :] = jnp.sum(z, axis=1, keepdims=True)
    q_ref[0, :, :] = jnp.sum(z * z, axis=1, keepdims=True)


# ---------------------------------------------------------------------------
# Pass 3: recompute conv2, BN2 + shortcut-BN (fused FMAs) + residual + ReLU
# ---------------------------------------------------------------------------
def _residual_kernel(h1_ref, hsc_ref, p1_ref, w2_ref, m_ref, p23_ref, o_ref):
    z2 = _conv2_pre(h1_ref, p1_ref, w2_ref, m_ref)
    p = p23_ref[...]
    sc = hsc_ref[...].astype(jnp.float32)
    o_ref[...] = jnp.maximum(z2 * p[:, 0:1] + p[:, 1:2]
                             + sc * p[:, 2:3] + p[:, 3:4], 0.0)


# ---------------------------------------------------------------------------
# Wrapper
# ---------------------------------------------------------------------------
def _pick_tile_rows(b, w_out, max_lanes=8192, min_grid=4):
    """Whole output rows per tile; largest 128-multiple lane width wins.
    Prefer keeping >= min_grid grid steps when tiles are already large so the
    "parallel" grid axis can shard across v7x's two TensorCores."""
    cands = [tb for tb in range(1, b + 1)
             if b % tb == 0 and (tb * w_out) % 128 == 0 and tb * w_out <= max_lanes]
    if not cands:
        return b      # fallback: single full-array tile (block == full dims)
    parallel = [tb for tb in cands if b // tb >= min_grid and tb * w_out >= 4096]
    return max(parallel) if parallel else max(cands)


def _scale_bias(s, q, gamma, beta, count, eps):
    # Training-mode BatchNorm (biased batch variance), one-pass in f32.
    mean = s / count
    var = q / count - mean * mean
    scale = gamma * jax.lax.rsqrt(var + eps)
    return scale, beta - mean * scale


def basic_block_forward(x, params, stride=1, compute_dtype=jnp.bfloat16,
                        store_dtype=None):
    """Forward pass of BasicBlock (training-mode BN statistics). x: NCHW f32."""
    if store_dtype is None:
        store_dtype = compute_dtype          # bf16 intermediates in bf16 mode
    N, Cin, H, W = x.shape
    Cout = params["w1"].shape[0]
    assert Cout % 8 == 0, "planes must be a multiple of 8 for the tiled layout"
    W_out = (W - 1) // stride + 1
    B = N * H
    P = B * W_out
    Cin8 = -(-Cin // 8) * 8                  # pad channels to keep taps 8-row aligned

    # channels on sublanes, flattened N*H rows x W positions on lanes
    xT = jnp.transpose(x, (1, 0, 2, 3)).reshape(Cin, B, W)
    if Cin8 != Cin:
        xT = jnp.pad(xT, ((0, Cin8 - Cin), (0, 0), (0, 0)))

    # conv1 (Cout,Cin,1,K) + 1x1 shortcut folded into one (2*Cout, K*Cin8) weight;
    # the shortcut rows only touch the unshifted (k == PAD) tap.
    w1t = jnp.zeros((Cout, K, Cin8), jnp.float32)
    w1t = w1t.at[:, :, :Cin].set(jnp.transpose(params["w1"][:, :, 0, :], (0, 2, 1)))
    wcat = jnp.zeros((2 * Cout, K * Cin8), jnp.float32)
    wcat = wcat.at[:Cout].set(w1t.reshape(Cout, K * Cin8))
    wcat = wcat.at[Cout:, PAD * Cin8:PAD * Cin8 + Cin].set(params["ws"][:, :, 0, 0])
    wcat = wcat.astype(compute_dtype)

    w2t = jnp.transpose(params["w2"][:, :, 0, :], (0, 2, 1)).reshape(Cout, K * Cout)
    w2t = w2t.astype(compute_dtype)

    TB = _pick_tile_rows(B, W_out)           # whole rows per tile
    TP = TB * W_out                          # lane width per tile
    G = B // TB

    # per-tap validity mask: zero where the shifted W index leaves [0, W_out)
    wpos = jnp.arange(TP, dtype=jnp.int32) % W_out
    offs = jnp.arange(K, dtype=jnp.int32)[:, None] - PAD
    m2 = ((wpos[None, :] + offs >= 0) &
          (wpos[None, :] + offs < W_out)).astype(jnp.float32)

    cparams = pltpu.CompilerParams(
        dimension_semantics=("parallel",),            # 2-TC sharding on v7x
        vmem_limit_bytes=32 * 1024 * 1024)

    h_spec = pl.BlockSpec((Cout, TP), lambda g: (0, g))
    h_shape = jax.ShapeDtypeStruct((Cout, P), store_dtype)
    st1_spec = pl.BlockSpec((1, 2 * Cout, 1), lambda g: (g, 0, 0))
    st1_shape = jax.ShapeDtypeStruct((G, 2 * Cout, 1), jnp.float32)

    # ---- pass 1: conv1 + fused 1x1 shortcut, per-tile BN statistics ----
    if stride == 1:
        x_in = xT.reshape(Cin8, P).astype(compute_dtype)
        h1, hsc, s1, q1 = pl.pallas_call(
            _conv1_roll_kernel,
            grid=(G,),
            in_specs=[
                pl.BlockSpec((Cin8, TP), lambda g: (0, g)),
                pl.BlockSpec((2 * Cout, K * Cin8), lambda g: (0, 0)),
                pl.BlockSpec((K, TP), lambda g: (0, 0)),
            ],
            out_specs=[h_spec, h_spec, st1_spec, st1_spec],
            out_shape=[h_shape, h_shape, st1_shape, st1_shape],
            compiler_params=cparams,
        )(x_in, wcat, m2)
    else:
        xpad = jnp.pad(xT, ((0, 0), (0, 0), (PAD, PAD)))
        taps = [xpad[:, :, k:k + stride * (W_out - 1) + 1:stride] for k in range(K)]
        xcol = jnp.stack(taps, axis=0).reshape(K * Cin8, P).astype(compute_dtype)
        h1, hsc, s1, q1 = pl.pallas_call(
            _conv1_col_kernel,
            grid=(G,),
            in_specs=[
                pl.BlockSpec((K * Cin8, TP), lambda g: (0, g)),
                pl.BlockSpec((2 * Cout, K * Cin8), lambda g: (0, 0)),
            ],
            out_specs=[h_spec, h_spec, st1_spec, st1_spec],
            out_shape=[h_shape, h_shape, st1_shape, st1_shape],
            compiler_params=cparams,
        )(xcol, wcat)

    cnt = jnp.float32(P)
    s1 = jnp.sum(s1, axis=0)[:, 0]
    q1 = jnp.sum(q1, axis=0)[:, 0]
    scale1, bias1 = _scale_bias(s1[:Cout], q1[:Cout], params["g1"], params["b1"], cnt, EPS)
    scale_s, bias_s = _scale_bias(s1[Cout:], q1[Cout:], params["gs"], params["bs"], cnt, EPS)
    p1 = jnp.stack([scale1, bias1], axis=1)               # (Cout, 2)

    # ---- pass 2: BN1 + ReLU + conv2, per-tile BN statistics only ----
    s2, q2 = pl.pallas_call(
        _conv2_stats_kernel,
        grid=(G,),
        in_specs=[
            pl.BlockSpec((Cout, TP), lambda g: (0, g)),
            pl.BlockSpec((Cout, 2), lambda g: (0, 0)),
            pl.BlockSpec((Cout, K * Cout), lambda g: (0, 0)),
            pl.BlockSpec((K, TP), lambda g: (0, 0)),
        ],
        out_specs=[pl.BlockSpec((1, Cout, 1), lambda g: (g, 0, 0))] * 2,
        out_shape=[jax.ShapeDtypeStruct((G, Cout, 1), jnp.float32)] * 2,
        compiler_params=cparams,
    )(h1, p1, w2t, m2)

    s2 = jnp.sum(s2, axis=0)[:, 0]
    q2 = jnp.sum(q2, axis=0)[:, 0]
    scale2, bias2 = _scale_bias(s2, q2, params["g2"], params["b2"], cnt, EPS)
    p23 = jnp.stack([scale2, bias2, scale_s, bias_s], axis=1)   # (Cout, 4)

    # ---- pass 3: recompute conv2, BN2 + BN_shortcut + residual add + ReLU ----
    out = pl.pallas_call(
        _residual_kernel,
        grid=(G,),
        in_specs=[
            pl.BlockSpec((Cout, TP), lambda g: (0, g)),      # conv1 pre-BN
            pl.BlockSpec((Cout, TP), lambda g: (0, g)),      # shortcut pre-BN
            pl.BlockSpec((Cout, 2), lambda g: (0, 0)),
            pl.BlockSpec((Cout, K * Cout), lambda g: (0, 0)),
            pl.BlockSpec((K, TP), lambda g: (0, 0)),
            pl.BlockSpec((Cout, 4), lambda g: (0, 0)),
        ],
        out_specs=pl.BlockSpec((Cout, TP), lambda g: (0, g)),
        out_shape=jax.ShapeDtypeStruct((Cout, P), jnp.float32),
        compiler_params=cparams,
    )(h1, hsc, p1, w2t, m2, p23)

    # (Cout, N*H*W_out) -> NCHW
    return jnp.transpose(out.reshape(Cout, N, H, W_out), (1, 0, 2, 3))


# ---------------------------------------------------------------------------
# Pure-JAX reference mirroring the PyTorch forward (training-mode BN)
# ---------------------------------------------------------------------------
def ref_forward(x, params, stride=1, eps=EPS):
    def conv(v, w, sw, pw):
        return jax.lax.conv_general_dilated(
            v, w, window_strides=(1, sw), padding=((0, 0), (pw, pw)),
            dimension_numbers=("NCHW", "OIHW", "NCHW"),
            precision=jax.lax.Precision.HIGHEST)

    def bn(v, g, b):
        mean = jnp.mean(v, axis=(0, 2, 3), keepdims=True)
        var = jnp.mean(jnp.square(v - mean), axis=(0, 2, 3), keepdims=True)
        return ((v - mean) / jnp.sqrt(var + eps) * g[None, :, None, None]
                + b[None, :, None, None])

    h = jax.nn.relu(bn(conv(x, params["w1"], stride, PAD), params["g1"], params["b1"]))
    h = bn(conv(h, params["w2"], 1, PAD), params["g2"], params["b2"])
    s = bn(conv(x, params["ws"], stride, 0), params["gs"], params["bs"])
    return jax.nn.relu(h + s)


if __name__ == "__main__":
    # Small shapes consistent with the module: NCHW input, in_planes=4, planes=8.
    N, Cin, H, W = 2, 4, 16, 16
    planes = 8

    key = jax.random.PRNGKey(0)
    kx, k1, k2, k3 = jax.random.split(key, 4)
    x = jax.random.normal(kx, (N, Cin, H, W), jnp.float32)
    params = {
        "w1": 0.1 * jax.random.normal(k1, (planes, Cin, 1, K), jnp.float32),
        "g1": jnp.ones((planes,), jnp.float32),
        "b1": jnp.zeros((planes,), jnp.float32),
        "w2": 0.1 * jax.random.normal(k2, (planes, planes, 1, K), jnp.float32),
        "g2": jnp.ones((planes,), jnp.float32),
        "b2": jnp.zeros((planes,), jnp.float32),
        "ws": 0.1 * jax.random.normal(k3, (planes, Cin, 1, 1), jnp.float32),
        "gs": jnp.ones((planes,), jnp.float32),
        "bs": jnp.zeros((planes,), jnp.float32),
    }
    # TODO(synk): BatchNorm running_mean/running_var updates (training-mode side
    # effects) are not materialized; only the forward output is produced.

    # f32 operands -> tight tolerance; bf16 operands + bf16 intermediates ->
    # loosened tolerance (accumulation and BN/elementwise math stay f32).
    cases = [
        (1, jnp.float32, 2e-3),
        (1, jnp.bfloat16, 6e-2),
        (2, jnp.float32, 2e-3),
    ]
    for stride, dtype, tol in cases:
        out = jax.block_until_ready(
            basic_block_forward(x, params, stride=stride, compute_dtype=dtype))
        ref = ref_forward(x, params, stride=stride)
        w_out = (W - 1) // stride + 1
        assert out.shape == (N, planes, H, w_out), out.shape
        err = float(jnp.max(jnp.abs(out - ref)))
        assert jnp.allclose(out, ref, atol=tol, rtol=tol), (stride, str(dtype), err)

    print("KERNEL_OK")
</pallas_src>

<mosaic_0001>
module attributes {stable_mosaic.version = 11 : i64} {
  func.func @_conv1_roll_kernel(%arg0: i32, %arg1: memref<8x512xf32, #tpu.memory_space<vmem>>, %arg2: memref<16x72xf32, #tpu.memory_space<vmem>>, %arg3: memref<9x512xf32, #tpu.memory_space<vmem>>, %arg4: memref<8x512xf32, #tpu.memory_space<vmem>>, %arg5: memref<8x512xf32, #tpu.memory_space<vmem>>, %arg6: memref<1x16x1xf32, #tpu.memory_space<vmem>>, %arg7: memref<1x16x1xf32, #tpu.memory_space<vmem>>) attributes {dimension_semantics = [#tpu.dimension_semantics<parallel>], iteration_bounds = array<i64: 1>, scalar_prefetch = 0 : i64, scratch_operands = 0 : i64, tpu.core_type = #tpu.core_type<tc>, window_params = [{transform_indices = @transform_0, window_bounds = array<i64: 8, 512>}, {pipeline_mode = #tpu.pipeline_mode<synchronous>, transform_indices = @transform_1, window_bounds = array<i64: 16, 72>}, {pipeline_mode = #tpu.pipeline_mode<synchronous>, transform_indices = @transform_2, window_bounds = array<i64: 9, 512>}, {transform_indices = @transform_3, window_bounds = array<i64: 8, 512>}, {transform_indices = @transform_4, window_bounds = array<i64: 8, 512>}, {transform_indices = @transform_5, window_bounds = array<i64: 1, 16, 1>}, {transform_indices = @transform_6, window_bounds = array<i64: 1, 16, 1>}]} {
    %c0 = arith.constant 0 : index
    %c0_0 = arith.constant 0 : index
    %0 = vector.load %arg1[%c0, %c0_0] : memref<8x512xf32, #tpu.memory_space<vmem>>, vector<8x512xf32>
    %c0_1 = arith.constant 0 : index
    %c0_2 = arith.constant 0 : index
    %1 = vector.load %arg3[%c0_1, %c0_2] : memref<9x512xf32, #tpu.memory_space<vmem>>, vector<9x512xf32>
    %2 = vector.extract_strided_slice %1 {offsets = [0, 0], sizes = [1, 512], strides = [1, 1]} : vector<9x512xf32> to vector<1x512xf32>
    %c4_i32 = arith.constant 4 : i32
    %3 = tpu.dynamic_rotate %0 by %c4_i32 dim 1 : vector<8x512xf32>, i32 -> vector<8x512xf32>
    %4 = vector.broadcast %2 : vector<1x512xf32> to vector<8x512xf32>
    %5 = arith.mulf %3, %4 : vector<8x512xf32>
    %6 = vector.extract_strided_slice %1 {offsets = [1, 0], sizes = [1, 512], strides = [1, 1]} : vector<9x512xf32> to vector<1x512xf32>
    %c3_i32 = arith.constant 3 : i32
    %7 = tpu.dynamic_rotate %0 by %c3_i32 dim 1 : vector<8x512xf32>, i32 -> vector<8x512xf32>
    %8 = vector.broadcast %6 : vector<1x512xf32> to vector<8x512xf32>
    %9 = arith.mulf %7, %8 : vector<8x512xf32>
    %10 = vector.extract_strided_slice %1 {offsets = [2, 0], sizes = [1, 512], strides = [1, 1]} : vector<9x512xf32> to vector<1x512xf32>
    %c2_i32 = arith.constant 2 : i32
    %11 = tpu.dynamic_rotate %0 by %c2_i32 dim 1 : vector<8x512xf32>, i32 -> vector<8x512xf32>
    %12 = vector.broadcast %10 : vector<1x512xf32> to vector<8x512xf32>
    %13 = arith.mulf %11, %12 : vector<8x512xf32>
    %14 = vector.extract_strided_slice %1 {offsets = [3, 0], sizes = [1, 512], strides = [1, 1]} : vector<9x512xf32> to vector<1x512xf32>
    %c1_i32 = arith.constant 1 : i32
    %15 = tpu.dynamic_rotate %0 by %c1_i32 dim 1 : vector<8x512xf32>, i32 -> vector<8x512xf32>
    %16 = vector.broadcast %14 : vector<1x512xf32> to vector<8x512xf32>
    %17 = arith.mulf %15, %16 : vector<8x512xf32>
    %18 = vector.extract_strided_slice %1 {offsets = [5, 0], sizes = [1, 512], strides = [1, 1]} : vector<9x512xf32> to vector<1x512xf32>
    %c511_i32 = arith.constant 511 : i32
    %19 = tpu.dynamic_rotate %0 by %c511_i32 dim 1 : vector<8x512xf32>, i32 -> vector<8x512xf32>
    %20 = vector.broadcast %18 : vector<1x512xf32> to vector<8x512xf32>
    %21 = arith.mulf %19, %20 : vector<8x512xf32>
    %22 = vector.extract_strided_slice %1 {offsets = [6, 0], sizes = [1, 512], strides = [1, 1]} : vector<9x512xf32> to vector<1x512xf32>
    %c510_i32 = arith.constant 510 : i32
    %23 = tpu.dynamic_rotate %0 by %c510_i32 dim 1 : vector<8x512xf32>, i32 -> vector<8x512xf32>
    %24 = vector.broadcast %22 : vector<1x512xf32> to vector<8x512xf32>
    %25 = arith.mulf %23, %24 : vector<8x512xf32>
    %26 = vector.extract_strided_slice %1 {offsets = [7, 0], sizes = [1, 512], strides = [1, 1]} : vector<9x512xf32> to vector<1x512xf32>
    %c509_i32 = arith.constant 509 : i32
    %27 = tpu.dynamic_rotate %0 by %c509_i32 dim 1 : vector<8x512xf32>, i32 -> vector<8x512xf32>
    %28 = vector.broadcast %26 : vector<1x512xf32> to vector<8x512xf32>
    %29 = arith.mulf %27, %28 : vector<8x512xf32>
    %30 = vector.extract_strided_slice %1 {offsets = [8, 0], sizes = [1, 512], strides = [1, 1]} : vector<9x512xf32> to vector<1x512xf32>
    %c508_i32 = arith.constant 508 : i32
    %31 = tpu.dynamic_rotate %0 by %c508_i32 dim 1 : vector<8x512xf32>, i32 -> vector<8x512xf32>
    %32 = vector.broadcast %30 : vector<1x512xf32> to vector<8x512xf32>
    %33 = arith.mulf %31, %32 : vector<8x512xf32>
    %34 = tpu.concatenate %5, %9, %13, %17, %0, %21, %25, %29, %33 in 0 : vector<8x512xf32>, vector<8x512xf32>, vector<8x512xf32>, vector<8x512xf32>, vector<8x512xf32>, vector<8x512xf32>, vector<8x512xf32>, vector<8x512xf32>, vector<8x512xf32> -> vector<72x512xf32>
    %c0_3 = arith.constant 0 : index
    %c0_4 = arith.constant 0 : index
    %35 = vector.load %arg2[%c0_3, %c0_4] : memref<16x72xf32, #tpu.memory_space<vmem>>, vector<16x72xf32>
    %cst = arith.constant dense<0.000000e+00> : vector<16x512xf32>
    %36 = tpu.matmul %35, %34, %cst {dimension_numbers = #tpu.dot_dimension_numbers<[1], [0], [0], [1], [0, 0, 1, 1], [], []>, precision = #tpu.contract_precision<fp32>} : vector<16x72xf32>, vector<72x512xf32>, vector<16x512xf32> -> vector<16x512xf32>
    %37 = vector.extract_strided_slice %36 {offsets = [0, 0], sizes = [8, 512], strides = [1, 1]} : vector<16x512xf32> to vector<8x512xf32>
    %c0_5 = arith.constant 0 : index
    %c0_6 = arith.constant 0 : index
    %38 = vector.load %arg4[%c0_5, %c0_6] : memref<8x512xf32, #tpu.memory_space<vmem>>, vector<8x512xf32>
    tpu.vector_store %arg4[%c0_5, %c0_6], %37 {strides = array<i32>} : memref<8x512xf32, #tpu.memory_space<vmem>>, vector<8x512xf32>,
    %39 = vector.extract_strided_slice %36 {offsets = [8, 0], sizes = [8, 512], strides = [1, 1]} : vector<16x512xf32> to vector<8x512xf32>
    %c0_7 = arith.constant 0 : index
    %c0_8 = arith.constant 0 : index
    %40 = vector.load %arg5[%c0_7, %c0_8] : memref<8x512xf32, #tpu.memory_space<vmem>>, vector<8x512xf32>
    tpu.vector_store %arg5[%c0_7, %c0_8], %39 {strides = array<i32>} : memref<8x512xf32, #tpu.memory_space<vmem>>, vector<8x512xf32>,
    %cst_9 = arith.constant dense<0.000000e+00> : vector<16xf32>
    %41 = vector.multi_reduction <add>, %36, %cst_9 [1] : vector<16x512xf32> to vector<16xf32>
    %42 = vector.shape_cast %41 : vector<16xf32> to vector<16x1xf32>
    %c0_10 = arith.constant 0 : index
    %c0_11 = arith.constant 0 : index
    %c0_12 = arith.constant 0 : index
    %43 = vector.load %arg6[%c0_10, %c0_11, %c0_12] : memref<1x16x1xf32, #tpu.memory_space<vmem>>, vector<1x16x1xf32>
    %44 = vector.shape_cast %43 : vector<1x16x1xf32> to vector<16x1xf32>
    %45 = vector.shape_cast %42 : vector<16x1xf32> to vector<1x16x1xf32>
    tpu.vector_store %arg6[%c0_10, %c0_11, %c0_12], %45 {strides = array<i32>} : memref<1x16x1xf32, #tpu.memory_space<vmem>>, vector<1x16x1xf32>,
    %46 = arith.mulf %36, %36 : vector<16x512xf32>
    %cst_13 = arith.constant dense<0.000000e+00> : vector<16xf32>
    %47 = vector.multi_reduction <add>, %46, %cst_13 [1] : vector<16x512xf32> to vector<16xf32>
    %48 = vector.shape_cast %47 : vector<16xf32> to vector<16x1xf32>
    %c0_14 = arith.constant 0 : index
    %c0_15 = arith.constant 0 : index
    %c0_16 = arith.constant 0 : index
    %49 = vector.load %arg7[%c0_14, %c0_15, %c0_16] : memref<1x16x1xf32, #tpu.memory_space<vmem>>, vector<1x16x1xf32>
    %50 = vector.shape_cast %49 : vector<1x16x1xf32> to vector<16x1xf32>
    %51 = vector.shape_cast %48 : vector<16x1xf32> to vector<1x16x1xf32>
    tpu.vector_store %arg7[%c0_14, %c0_15, %c0_16], %51 {strides = array<i32>} : memref<1x16x1xf32, #tpu.memory_space<vmem>>, vector<1x16x1xf32>,
    return
  }
  func.func @transform_0(%arg0: i32) -> (i32, i32) {
    %c0_i32 = arith.constant 0 : i32
    %c0_i32_0 = arith.constant 0 : i32
    return %c0_i32, %arg0 : i32, i32
  }
  func.func @transform_1(%arg0: i32) -> (i32, i32) {
    %c0_i32 = arith.constant 0 : i32
    %c0_i32_0 = arith.constant 0 : i32
    %c0_i32_1 = arith.constant 0 : i32
    return %c0_i32, %c0_i32_0 : i32, i32
  }
  func.func @transform_2(%arg0: i32) -> (i32, i32) {
    %c0_i32 = arith.constant 0 : i32
    %c0_i32_0 = arith.constant 0 : i32
    %c0_i32_1 = arith.constant 0 : i32
    return %c0_i32, %c0_i32_0 : i32, i32
  }
  func.func @transform_3(%arg0: i32) -> (i32, i32) {
    %c0_i32 = arith.constant 0 : i32
    %c0_i32_0 = arith.constant 0 : i32
    return %c0_i32, %arg0 : i32, i32
  }
  func.func @transform_4(%arg0: i32) -> (i32, i32) {
    %c0_i32 = arith.constant 0 : i32
    %c0_i32_0 = arith.constant 0 : i32
    return %c0_i32, %arg0 : i32, i32
  }
  func.func @transform_5(%arg0: i32) -> (i32, i32, i32) {
    %c0_i32 = arith.constant 0 : i32
    %c0_i32_0 = arith.constant 0 : i32
    %c0_i32_1 = arith.constant 0 : i32
    return %arg0, %c0_i32, %c0_i32_0 : i32, i32, i32
  }
  func.func @transform_6(%arg0: i32) -> (i32, i32, i32) {
    %c0_i32 = arith.constant 0 : i32
    %c0_i32_0 = arith.constant 0 : i32
    %c0_i32_1 = arith.constant 0 : i32
    return %arg0, %c0_i32, %c0_i32_0 : i32, i32, i32
  }
}

</mosaic_0001>

<llo_original>
// kernel: tpu_custom_call.1
$region0: #{tpu_custom_call.1}
  #allocation0 [shape = 'u32[]', space=smem, size = 0x4, offset = 0x4, fixed_abs, tag = 'smem constant byte address 0x4 - core index']
  #allocation1 [shape = 'u32[144,128]{1,0:T(1,128)}', space=vmem, size = 0x12000, scoped, tag = 'internal scratch']
  %s0 = inlined_call_operand.hbm [shape: f32[8,512], index: 0, kind: input, shape index: {}]
  %s1 = inlined_call_operand.hbm [shape: f32[16,72], index: 1, kind: input, shape index: {}]
  %s2 = inlined_call_operand.hbm [shape: f32[9,512], index: 2, kind: input, shape index: {}]
  %s3 = inlined_call_operand.hbm [shape: f32[8,512], index: 3, kind: output, shape index: {0}]
  %s4 = inlined_call_operand.hbm [shape: f32[8,512], index: 4, kind: output, shape index: {1}]
  %s5 = inlined_call_operand.vmem [shape: f32[1,16,1], index: 5, kind: output, shape index: {2}]
  %s6 = inlined_call_operand.vmem [shape: f32[1,16,1], index: 6, kind: output, shape index: {3}]
  %7 = xla_tuple %s3, %s4, %s5, %s6
  %s8 = sld [smem:[#allocation0]]
  $region58: #{tpu_custom_call.1} parent=0
    _
  %s10 = ssub.s32 1, %s8
  %s11 = scalar_select 0, %s10, %s8
  $region1: #{tpu_custom_call.1} parent=0
    #allocation2 [shape = 'u8[16384]{0}', space=vmem, size = 0x4000, scoped, tag = 'input window, operand 0, single buffered']
    #allocation3 [shape = 's32[1]{0}', space=sflag, size = 0x4, scoped, tag = 'scoped memory for tpu_custom_call.1']
    #allocation4 [shape = 's32[1]{0}', space=sflag, size = 0x4, scoped, tag = 'scoped memory for tpu_custom_call.1']
    #allocation5 [shape = 'u8[8192]{0}', space=vmem, size = 0x2000, scoped, tag = 'input window, operand 1, single buffered']
    #allocation6 [shape = 's32[1]{0}', space=sflag, size = 0x4, scoped, tag = 'scoped memory for tpu_custom_call.1']
    #allocation7 [shape = 'u8[32768]{0}', space=vmem, size = 0x8000, scoped, tag = 'input window, operand 2, single buffered']
    #allocation8 [shape = 'u8[16384]{0}', space=vmem, size = 0x4000, scoped, tag = 'output window, operand 0, single buffered']
    #allocation9 [shape = 'u8[16384]{0}', space=vmem, size = 0x4000, scoped, tag = 'output window, operand 1, single buffered']
    #allocation10 [shape = 's32[1]{0}', space=sflag, size = 0x4, scoped, tag = 'scoped memory for tpu_custom_call.1']
    %12 = vsyncpa [#allocation3], 0
    %13 = vsyncpa [#allocation6], 0
    %14 = vsyncpa [#allocation4], 0
    %15 = vsyncpa [#allocation10], 0
    // Predicated region
    $region2: #{tpu_custom_call.1} parent=1 // pred_check
      _
    $region3: #{tpu_custom_call.1} parent=1 // pred_check_branch
      %17 = sbr.rel (0) target = $region5
    $region4: #{tpu_custom_call.1} parent=1 // pred_region
      %s19 = ssub.s32 512, 512
      %20 = vsyncadd [#allocation3], %s19
      %s22 = sshll.u32 [#allocation2], 4
      %s23 = int_to_ptr.vmem [resolvable:$true] %s22
      %25 = dma.hbm_to_vmem [thread:$0]  %s0, 512, %s23, [#allocation3]
    $region5: #{tpu_custom_call.1} parent=1 // pred_fallthru
      _
    // Predicated region
    $region6: #{tpu_custom_call.1} parent=1 // pred_check
      _
    $region7: #{tpu_custom_call.1} parent=1 // pred_check_branch
      %27 = sbr.rel (0) target = $region9
    $region8: #{tpu_custom_call.1} parent=1 // pred_region
      %s29 = ssub.s32 256, 256
      %30 = vsyncadd [#allocation6], %s29
      %s31 = sshll.u32 [#allocation5], 4
      %s32 = int_to_ptr.vmem [resolvable:$true] %s31
      %37 = dma.hbm_to_vmem [thread:$0]  %s1, 256, %s32, [#allocation6], 128, 128, 8
    $region9: #{tpu_custom_call.1} parent=1 // pred_fallthru
      _
    // Predicated region
    $region10: #{tpu_custom_call.1} parent=1 // pred_check
      _
    $region11: #{tpu_custom_call.1} parent=1 // pred_check_branch
      %39 = sbr.rel (0) target = $region13
    $region12: #{tpu_custom_call.1} parent=1 // pred_region
      %s41 = ssub.s32 1024, 1024
      %42 = vsyncadd [#allocation6], %s41
      %s43 = sshll.u32 [#allocation7], 4
      %s44 = int_to_ptr.vmem [resolvable:$true] %s43
      %49 = dma.hbm_to_vmem [thread:$0]  %s2, 1024, %s44, [#allocation6], 512, 512, 32
    $region13: #{tpu_custom_call.1} parent=1 // pred_fallthru
      _
    // Predicated region
    $region14: #{tpu_custom_call.1} parent=1 // pred_check
      _
    $region15: #{tpu_custom_call.1} parent=1 // pred_check_branch
      %51 = sbr.rel (0) target = $region17
    $region16: #{tpu_custom_call.1} parent=1 // pred_region
      %52 = dma.done [#allocation3], 512
    $region17: #{tpu_custom_call.1} parent=1 // pred_fallthru
      _
    // Predicated region
    $region18: #{tpu_custom_call.1} parent=1 // pred_check
      _
    $region19: #{tpu_custom_call.1} parent=1 // pred_check_branch
      %54 = sbr.rel (0) target = $region21
    $region20: #{tpu_custom_call.1} parent=1 // pred_region
      %55 = dma.done [#allocation6], 256
    $region21: #{tpu_custom_call.1} parent=1 // pred_fallthru
      _
    // Predicated region
    $region22: #{tpu_custom_call.1} parent=1 // pred_check
      _
    $region23: #{tpu_custom_call.1} parent=1 // pred_check_branch
      %57 = sbr.rel (0) target = $region25
    $region24: #{tpu_custom_call.1} parent=1 // pred_region
      %58 = dma.done [#allocation6], 1024
    $region25: #{tpu_custom_call.1} parent=1 // pred_fallthru
      _
    %v59 = vld [vmem:[#allocation2] sm:$0xff]
    %v60 = vld [vmem:[#allocation2 + $0x8] sm:$0xff]
    %v61 = vld [vmem:[#allocation2 + $0x10] sm:$0xff]
    %v62 = vld [vmem:[#allocation2 + $0x18] sm:$0xff]
    %v63 = vld [vmem:[#allocation7] sm:$0xff]
    %v64 = vld [vmem:[#allocation7 + $0x8] sm:$0xff]
    %v65 = vld [vmem:[#allocation7 + $0x10] sm:$0xff]
    %v66 = vld [vmem:[#allocation7 + $0x18] sm:$0xff]
    %v67 = vld [vmem:[#allocation7 + $0x20] sm:$0x1]
    %v68 = vld [vmem:[#allocation7 + $0x28] sm:$0x1]
    %v69 = vld [vmem:[#allocation7 + $0x30] sm:$0x1]
    %v70 = vld [vmem:[#allocation7 + $0x38] sm:$0x1]
    %71 = vrot.lane.b32.xlu0 %v59, 4
    %v72 = vpop.permute.xlu0 %71
    %73 = vrot.lane.b32.xlu0 %v60, 4
    %v74 = vpop.permute.xlu0 %73
    %75 = vrot.lane.b32.xlu0 %v61, 4
    %v76 = vpop.permute.xlu0 %75
    %77 = vrot.lane.b32.xlu0 %v62, 4
    %v78 = vpop.permute.xlu0 %77
    %v79 = vlaneseq
    %v80 = vand.u32 %v79, 127
    %vm81 = vcmp.lt.s32.totalorder %v80, 4
    %v82 = vsel %vm81, %v76, %v78
    %v83 = vsel %vm81, %v74, %v76
    %v84 = vsel %vm81, %v72, %v74
    %v85 = vsel %vm81, %v78, %v72
    %v86 = vlaneseq
    %v87 = vshrl.u32 %v86, 7
    %v88 = vsub.s32 0, %v87
    %v89 = vrot.slane %v63, %v88
    %v90 = vlaneseq
    %v91 = vshrl.u32 %v90, 7
    %v92 = vsub.s32 0, %v91
    %v93 = vrot.slane %v64, %v92
    %v94 = vlaneseq
    %v95 = vshrl.u32 %v94, 7
    %v96 = vsub.s32 0, %v95
    %v97 = vrot.slane %v65, %v96
    %v98 = vlaneseq
    %v99 = vshrl.u32 %v98, 7
    %v100 = vsub.s32 0, %v99
    %v101 = vrot.slane %v66, %v100
    %v102 = vmul.f32 %v85, %v89
    %v103 = vmul.f32 %v84, %v93
    %v104 = vmul.f32 %v83, %v97
    %v105 = vmul.f32 %v82, %v101
    %106 = vrot.lane.b32.xlu0 %v59, 3
    %v107 = vpop.permute.xlu0 %106
    %108 = vrot.lane.b32.xlu0 %v60, 3
    %v109 = vpop.permute.xlu0 %108
    %110 = vrot.lane.b32.xlu0 %v61, 3
    %v111 = vpop.permute.xlu0 %110
    %112 = vrot.lane.b32.xlu0 %v62, 3
    %v113 = vpop.permute.xlu0 %112
    %vm114 = vcmp.lt.s32.totalorder %v80, 3
    %v115 = vsel %vm114, %v111, %v113
    %v116 = vsel %vm114, %v109, %v111
    %v117 = vsel %vm114, %v107, %v109
    %v118 = vsel %vm114, %v113, %v107
    %v119 = vlaneseq
    %v120 = vshrl.u32 %v119, 7
    %v121 = vsub.s32 1, %v120
    %v122 = vrot.slane %v63, %v121
    %v123 = vlaneseq
    %v124 = vshrl.u32 %v123, 7
    %v125 = vsub.s32 1, %v124
    %v126 = vrot.slane %v64, %v125
    %v127 = vlaneseq
    %v128 = vshrl.u32 %v127, 7
    %v129 = vsub.s32 1, %v128
    %v130 = vrot.slane %v65, %v129
    %v131 = vlaneseq
    %v132 = vshrl.u32 %v131, 7
    %v133 = vsub.s32 1, %v132
    %v134 = vrot.slane %v66, %v133
    %v135 = vmul.f32 %v118, %v122
    %v136 = vmul.f32 %v117, %v126
    %v137 = vmul.f32 %v116, %v130
    %v138 = vmul.f32 %v115, %v134
    %139 = vrot.lane.b32.xlu0 %v59, 2
    %v140 = vpop.permute.xlu0 %139
    %141 = vrot.lane.b32.xlu0 %v60, 2
    %v142 = vpop.permute.xlu0 %141
    %143 = vrot.lane.b32.xlu0 %v61, 2
    %v144 = vpop.permute.xlu0 %143
    %145 = vrot.lane.b32.xlu0 %v62, 2
    %v146 = vpop.permute.xlu0 %145
    %vm147 = vcmp.lt.s32.totalorder %v80, 2
    %v148 = vsel %vm147, %v144, %v146
    %v149 = vsel %vm147, %v142, %v144
    %v150 = vsel %vm147, %v140, %v142
    %v151 = vsel %vm147, %v146, %v140
    %v152 = vlaneseq
    %v153 = vshrl.u32 %v152, 7
    %v154 = vsub.s32 2, %v153
    %v155 = vrot.slane %v63, %v154
    %v156 = vlaneseq
    %v157 = vshrl.u32 %v156, 7
    %v158 = vsub.s32 2, %v157
    %v159 = vrot.slane %v64, %v158
    %v160 = vlaneseq
    %v161 = vshrl.u32 %v160, 7
    %v162 = vsub.s32 2, %v161
    %v163 = vrot.slane %v65, %v162
    %v164 = vlaneseq
    %v165 = vshrl.u32 %v164, 7
    %v166 = vsub.s32 2, %v165
    %v167 = vrot.slane %v66, %v166
    %v168 = vmul.f32 %v151, %v155
    %v169 = vmul.f32 %v150, %v159
    %v170 = vmul.f32 %v149, %v163
    %v171 = vmul.f32 %v148, %v167
    %172 = vrot.lane.b32.xlu0 %v59, 1
    %v173 = vpop.permute.xlu0 %172
    %174 = vrot.lane.b32.xlu0 %v60, 1
    %v175 = vpop.permute.xlu0 %174
    %176 = vrot.lane.b32.xlu0 %v61, 1
    %v177 = vpop.permute.xlu0 %176
    %178 = vrot.lane.b32.xlu0 %v62, 1
    %v179 = vpop.permute.xlu0 %178
    %vm180 = vcmp.lt.s32.totalorder %v80, 1
    %v181 = vsel %vm180, %v177, %v179
    %v182 = vsel %vm180, %v175, %v177
    %v183 = vsel %vm180, %v173, %v175
    %v184 = vsel %vm180, %v179, %v173
    %v185 = vlaneseq
    %v186 = vshrl.u32 %v185, 7
    %v187 = vsub.s32 3, %v186
    %v188 = vrot.slane %v63, %v187
    %v189 = vlaneseq
    %v190 = vshrl.u32 %v189, 7
    %v191 = vsub.s32 3, %v190
    %v192 = vrot.slane %v64, %v191
    %v193 = vlaneseq
    %v194 = vshrl.u32 %v193, 7
    %v195 = vsub.s32 3, %v194
    %v196 = vrot.slane %v65, %v195
    %v197 = vlaneseq
    %v198 = vshrl.u32 %v197, 7
    %v199 = vsub.s32 3, %v198
    %v200 = vrot.slane %v66, %v199
    %v201 = vmul.f32 %v184, %v188
    %v202 = vmul.f32 %v183, %v192
    %v203 = vmul.f32 %v182, %v196
    %v204 = vmul.f32 %v181, %v200
    %205 = vrot.lane.b32.xlu0 %v59, 127
    %v206 = vpop.permute.xlu0 %205
    %207 = vrot.lane.b32.xlu0 %v60, 127
    %v208 = vpop.permute.xlu0 %207
    %209 = vrot.lane.b32.xlu0 %v61, 127
    %v210 = vpop.permute.xlu0 %209
    %211 = vrot.lane.b32.xlu0 %v62, 127
    %v212 = vpop.permute.xlu0 %211
    %vm213 = vcmp.lt.s32.totalorder %v80, 127
    %v214 = vsel %vm213, %v210, %v212
    %v215 = vsel %vm213, %v208, %v210
    %v216 = vsel %vm213, %v206, %v208
    %v217 = vsel %vm213, %v212, %v206
    %v218 = vlaneseq
    %v219 = vshrl.u32 %v218, 7
    %v220 = vsub.s32 5, %v219
    %v221 = vrot.slane %v63, %v220
    %v222 = vlaneseq
    %v223 = vshrl.u32 %v222, 7
    %v224 = vsub.s32 5, %v223
    %v225 = vrot.slane %v64, %v224
    %v226 = vlaneseq
    %v227 = vshrl.u32 %v226, 7
    %v228 = vsub.s32 5, %v227
    %v229 = vrot.slane %v65, %v228
    %v230 = vlaneseq
    %v231 = vshrl.u32 %v230, 7
    %v232 = vsub.s32 5, %v231
    %v233 = vrot.slane %v66, %v232
    %v234 = vmul.f32 %v216, %v221
    %v235 = vmul.f32 %v215, %v225
    %v236 = vmul.f32 %v214, %v229
    %v237 = vmul.f32 %v217, %v233
    %238 = vrot.lane.b32.xlu0 %v59, 126
    %v239 = vpop.permute.xlu0 %238
    %240 = vrot.lane.b32.xlu0 %v60, 126
    %v241 = vpop.permute.xlu0 %240
    %242 = vrot.lane.b32.xlu0 %v61, 126
    %v243 = vpop.permute.xlu0 %242
    %244 = vrot.lane.b32.xlu0 %v62, 126
    %v245 = vpop.permute.xlu0 %244
    %vm246 = vcmp.lt.s32.totalorder %v80, 126
    %v247 = vsel %vm246, %v243, %v245
    %v248 = vsel %vm246, %v241, %v243
    %v249 = vsel %vm246, %v239, %v241
    %v250 = vsel %vm246, %v245, %v239
    %v251 = vlaneseq
    %v252 = vshrl.u32 %v251, 7
    %v253 = vsub.s32 6, %v252
    %v254 = vrot.slane %v63, %v253
    %v255 = vlaneseq
    %v256 = vshrl.u32 %v255, 7
    %v257 = vsub.s32 6, %v256
    %v258 = vrot.slane %v64, %v257
    %v259 = vlaneseq
    %v260 = vshrl.u32 %v259, 7
    %v261 = vsub.s32 6, %v260
    %v262 = vrot.slane %v65, %v261
    %v263 = vlaneseq
    %v264 = vshrl.u32 %v263, 7
    %v265 = vsub.s32 6, %v264
    %v266 = vrot.slane %v66, %v265
    %v267 = vmul.f32 %v249, %v254
    %v268 = vmul.f32 %v248, %v258
    %v269 = vmul.f32 %v247, %v262
    %v270 = vmul.f32 %v250, %v266
    %271 = vrot.lane.b32.xlu0 %v59, 125
    %v272 = vpop.permute.xlu0 %271
    %273 = vrot.lane.b32.xlu0 %v60, 125
    %v274 = vpop.permute.xlu0 %273
    %275 = vrot.lane.b32.xlu0 %v61, 125
    %v276 = vpop.permute.xlu0 %275
    %277 = vrot.lane.b32.xlu0 %v62, 125
    %v278 = vpop.permute.xlu0 %277
    %vm279 = vcmp.lt.s32.totalorder %v80, 125
    %v280 = vsel %vm279, %v276, %v278
    %v281 = vsel %vm279, %v274, %v276
    %v282 = vsel %vm279, %v272, %v274
    %v283 = vsel %vm279, %v278, %v272
    %v284 = vlaneseq
    %v285 = vshrl.u32 %v284, 7
    %v286 = vsub.s32 7, %v285
    %v287 = vrot.slane %v63, %v286
    %v288 = vlaneseq
    %v289 = vshrl.u32 %v288, 7
    %v290 = vsub.s32 7, %v289
    %v291 = vrot.slane %v64, %v290
    %v292 = vlaneseq
    %v293 = vshrl.u32 %v292, 7
    %v294 = vsub.s32 7, %v293
    %v295 = vrot.slane %v65, %v294
    %v296 = vlaneseq
    %v297 = vshrl.u32 %v296, 7
    %v298 = vsub.s32 7, %v297
    %v299 = vrot.slane %v66, %v298
    %v300 = vmul.f32 %v282, %v287
    %v301 = vmul.f32 %v281, %v291
    %v302 = vmul.f32 %v280, %v295
    %v303 = vmul.f32 %v283, %v299
    %304 = vrot.lane.b32.xlu0 %v59, 124
    %v305 = vpop.permute.xlu0 %304
    %306 = vrot.lane.b32.xlu0 %v60, 124
    %v307 = vpop.permute.xlu0 %306
    %308 = vrot.lane.b32.xlu0 %v61, 124
    %v309 = vpop.permute.xlu0 %308
    %310 = vrot.lane.b32.xlu0 %v62, 124
    %v311 = vpop.permute.xlu0 %310
    %vm312 = vcmp.lt.s32.totalorder %v80, 124
    %v313 = vsel %vm312, %v309, %v311
    %v314 = vsel %vm312, %v307, %v309
    %v315 = vsel %vm312, %v305, %v307
    %v316 = vsel %vm312, %v311, %v305
    %v317 = vlaneseq
    %v318 = vshrl.u32 %v317, 7
    %v319 = vsub.s32 0, %v318
    %v320 = vrot.slane %v67, %v319
    %v321 = vlaneseq
    %v322 = vshrl.u32 %v321, 7
    %v323 = vsub.s32 0, %v322
    %v324 = vrot.slane %v68, %v323
    %v325 = vlaneseq
    %v326 = vshrl.u32 %v325, 7
    %v327 = vsub.s32 0, %v326
    %v328 = vrot.slane %v69, %v327
    %v329 = vlaneseq
    %v330 = vshrl.u32 %v329, 7
    %v331 = vsub.s32 0, %v330
    %v332 = vrot.slane %v70, %v331
    %v333 = vmul.f32 %v315, %v320
    %v334 = vmul.f32 %v314, %v324
    %v335 = vmul.f32 %v313, %v328
    %v336 = vmul.f32 %v316, %v332
    %v337 = vld [vmem:[#allocation5] sm:$0xff]
    %v338 = vld [vmem:[#allocation5 + $0x8] sm:$0xff]
    %vm339 = vcmask 588800
    %v341 = vsel %vm339, %v337, 0
    %v344 = vsel %vm339, %v338, 0
    %346 = vmatprep.subr.mxu0 0.0
    %347 = vmatpush1.msra.mxu0 0.0
    %348 = vmatprep.subr.mxu0 0.0
    %349 = vmatpush1.msra.mxu0 0.0
    %350 = vmatprep.subr.mxu0 0.0
    %351 = vmatpush1.msra.mxu0 0.0
    %352 = vmatprep.subr.mxu0 0.0
    %353 = vmatpush1.msra.mxu0 0.0
    %354 = vmatprep.subr.mxu0 0.0
    %355 = vmatpush1.msra.mxu0 0.0
    %356 = vmatprep.subr.mxu0 0.0
    %357 = vmatpush1.msra.mxu0 0.0
    %358 = vmatprep.subr.mxu0 0.0
    %359 = vmatpush1.msra.mxu0 0.0
    %v360 = vand.u32 %v334, 4294901760
    %361 = vmatprep.subr.mxu0 %v360
    %v362 = vand.u32 %v333, 4294901760
    %363 = vmatpush1.msra.mxu0 %v362
    %v364 = vand.u32 %v301, 4294901760
    %365 = vmatprep.subr.mxu0 %v364
    %v366 = vand.u32 %v300, 4294901760
    %367 = vmatpush1.msra.mxu0 %v366
    %v368 = vand.u32 %v268, 4294901760
    %369 = vmatprep.subr.mxu0 %v368
    %v370 = vand.u32 %v267, 4294901760
    %371 = vmatpush1.msra.mxu0 %v370
    %v372 = vand.u32 %v235, 4294901760
    %373 = vmatprep.subr.mxu0 %v372
    %v374 = vand.u32 %v234, 4294901760
    %375 = vmatpush1.msra.mxu0 %v374
    %v376 = vand.u32 %v60, 4294901760
    %377 = vmatprep.subr.mxu0 %v376
    %v378 = vand.u32 %v59, 4294901760
    %379 = vmatpush1.msra.mxu0 %v378
    %v380 = vand.u32 %v202, 4294901760
    %381 = vmatprep.subr.mxu0 %v380
    %v382 = vand.u32 %v201, 4294901760
    %383 = vmatpush1.msra.mxu0 %v382
    %v384 = vand.u32 %v169, 4294901760
    %385 = vmatprep.subr.mxu0 %v384
    %v386 = vand.u32 %v168, 4294901760
    %387 = vmatpush1.msra.mxu0 %v386
    %v388 = vand.u32 %v136, 4294901760
    %389 = vmatprep.subr.mxu0 %v388
    %v390 = vand.u32 %v135, 4294901760
    %391 = vmatpush1.msra.mxu0 %v390
    %v392 = vand.u32 %v103, 4294901760
    %393 = vmatprep.subr.mxu0 %v392
    %v394 = vand.u32 %v102, 4294901760
    %395 = vmatpush1.msra.mxu0 %v394
    %396 = vmatprep.subr.mxu0 0.0
    %397 = vmatpush2.msra.mxu0 0.0
    %398 = vmatprep.subr.mxu0 0.0
    %399 = vmatpush2.msra.mxu0 0.0
    %400 = vmatprep.subr.mxu0 0.0
    %401 = vmatpush2.msra.mxu0 0.0
    %402 = vmatprep.subr.mxu0 0.0
    %403 = vmatpush2.msra.mxu0 0.0
    %404 = vmatprep.subr.mxu0 0.0
    %405 = vmatpush2.msra.mxu0 0.0
    %406 = vmatprep.subr.mxu0 0.0
    %407 = vmatpush2.msra.mxu0 0.0
    %408 = vmatprep.subr.mxu0 0.0
    %409 = vmatpush2.msra.mxu0 0.0
    %410 = vmatprep.subr.mxu0 0.0
    %411 = vmatpush2.msra.mxu0 0.0
    %412 = vmatprep.subr.mxu0 0.0
    %413 = vmatpush2.msra.mxu0 0.0
    %414 = vmatprep.subr.mxu0 0.0
    %415 = vmatpush2.msra.mxu0 0.0
    %416 = vmatprep.subr.mxu0 0.0
    %417 = vmatpush2.msra.mxu0 0.0
    %418 = vmatprep.subr.mxu0 0.0
    %419 = vmatpush2.msra.mxu0 0.0
    %420 = vmatprep.subr.mxu0 0.0
    %421 = vmatpush2.msra.mxu0 0.0
    %422 = vmatprep.subr.mxu0 0.0
    %423 = vmatpush2.msra.mxu0 0.0
    %424 = vmatprep.subr.mxu0 0.0
    %425 = vmatpush2.msra.mxu0 0.0
    %426 = vmatprep.subr.mxu0 0.0
    %427 = vmatpush2.msra.mxu0 0.0
    %428 = vmatprep.mubr.f32.mxu0 0.0
    %v429 = vand.u32 %v341, 4294901760
    %v430 = vsub.f32 %v341, %v429
    %v431 = vand.u32 %v430, 4294901760
    %v432 = vsub.f32 %v430, %v431
    %v433 = vand.u32 %v432, 4294901760
    %434 = vmatmul.mubr.f32.gmra.mxu0 %v433
    %v435 = vpop.f32.mrf.mxu0
    %v436 = vadd.f32 0.0, %v435
    %v437 = vpop.f32.mrf.mxu0
    %v438 = vadd.f32 0.0, %v437
    %439 = vmatprep.mubr.f32.mxu0 0.0
    %v440 = vand.u32 %v344, 4294901760
    %v441 = vsub.f32 %v344, %v440
    %v442 = vand.u32 %v441, 4294901760
    %v443 = vsub.f32 %v441, %v442
    %v444 = vand.u32 %v443, 4294901760
    %445 = vmatmul.mubr.f32.gmra.mxu0 %v444
    %v446 = vpop.f32.mrf.mxu0
    %v447 = vadd.f32 0.0, %v446
    %v448 = vpop.f32.mrf.mxu0
    %v449 = vadd.f32 0.0, %v448
    %450 = vdwg.mxu0
    %451 = vmatprep.subr.mxu0 0.0
    %452 = vmatpush1.msra.mxu0 0.0
    %453 = vmatprep.subr.mxu0 0.0
    %454 = vmatpush1.msra.mxu0 0.0
    %455 = vmatprep.subr.mxu0 0.0
    %456 = vmatpush1.msra.mxu0 0.0
    %457 = vmatprep.subr.mxu0 0.0
    %458 = vmatpush1.msra.mxu0 0.0
    %459 = vmatprep.subr.mxu0 0.0
    %460 = vmatpush1.msra.mxu0 0.0
    %461 = vmatprep.subr.mxu0 0.0
    %462 = vmatpush1.msra.mxu0 0.0
    %463 = vmatprep.subr.mxu0 0.0
    %464 = vmatpush1.msra.mxu0 0.0
    %v465 = vand.u32 %v334, 4294901760
    %v466 = vsub.f32 %v334, %v465
    %v467 = vand.u32 %v466, 4294901760
    %v468 = vsub.f32 %v466, %v467
    %v469 = vand.u32 %v468, 4294901760
    %470 = vmatprep.subr.mxu0 %v469
    %v471 = vand.u32 %v333, 4294901760
    %v472 = vsub.f32 %v333, %v471
    %v473 = vand.u32 %v472, 4294901760
    %v474 = vsub.f32 %v472, %v473
    %v475 = vand.u32 %v474, 4294901760
    %476 = vmatpush1.msra.mxu0 %v475
    %v477 = vand.u32 %v301, 4294901760
    %v478 = vsub.f32 %v301, %v477
    %v479 = vand.u32 %v478, 4294901760
    %v480 = vsub.f32 %v478, %v479
    %v481 = vand.u32 %v480, 4294901760
    %482 = vmatprep.subr.mxu0 %v481
    %v483 = vand.u32 %v300, 4294901760
    %v484 = vsub.f32 %v300, %v483
    %v485 = vand.u32 %v484, 4294901760
    %v486 = vsub.f32 %v484, %v485
    %v487 = vand.u32 %v486, 4294901760
    %488 = vmatpush1.msra.mxu0 %v487
    %v489 = vand.u32 %v268, 4294901760
    %v490 = vsub.f32 %v268, %v489
    %v491 = vand.u32 %v490, 4294901760
    %v492 = vsub.f32 %v490, %v491
    %v493 = vand.u32 %v492, 4294901760
    %494 = vmatprep.subr.mxu0 %v493
    %v495 = vand.u32 %v267, 4294901760
    %v496 = vsub.f32 %v267, %v495
    %v497 = vand.u32 %v496, 4294901760
    %v498 = vsub.f32 %v496, %v497
    %v499 = vand.u32 %v498, 4294901760
    %500 = vmatpush1.msra.mxu0 %v499
    %v501 = vand.u32 %v235, 4294901760
    %v502 = vsub.f32 %v235, %v501
    %v503 = vand.u32 %v502, 4294901760
    %v504 = vsub.f32 %v502, %v503
    %v505 = vand.u32 %v504, 4294901760
    %506 = vmatprep.subr.mxu0 %v505
    %v507 = vand.u32 %v234, 4294901760
    %v508 = vsub.f32 %v234, %v507
    %v509 = vand.u32 %v508, 4294901760
    %v510 = vsub.f32 %v508, %v509
    %v511 = vand.u32 %v510, 4294901760
    %512 = vmatpush1.msra.mxu0 %v511
    %v513 = vand.u32 %v60, 4294901760
    %v514 = vsub.f32 %v60, %v513
    %v515 = vand.u32 %v514, 4294901760
    %v516 = vsub.f32 %v514, %v515
    %v517 = vand.u32 %v516, 4294901760
    %518 = vmatprep.subr.mxu0 %v517
    %v519 = vand.u32 %v59, 4294901760
    %v520 = vsub.f32 %v59, %v519
    %v521 = vand.u32 %v520, 4294901760
    %v522 = vsub.f32 %v520, %v521
    %v523 = vand.u32 %v522, 4294901760
    %524 = vmatpush1.msra.mxu0 %v523
    %v525 = vand.u32 %v202, 4294901760
    %v526 = vsub.f32 %v202, %v525
    %v527 = vand.u32 %v526, 4294901760
    %v528 = vsub.f32 %v526, %v527
    %v529 = vand.u32 %v528, 4294901760
    %530 = vmatprep.subr.mxu0 %v529
    %v531 = vand.u32 %v201, 4294901760
    %v532 = vsub.f32 %v201, %v531
    %v533 = vand.u32 %v532, 4294901760
    %v534 = vsub.f32 %v532, %v533
    %v535 = vand.u32 %v534, 4294901760
    %536 = vmatpush1.msra.mxu0 %v535
    %v537 = vand.u32 %v169, 4294901760
    %v538 = vsub.f32 %v169, %v537
    %v539 = vand.u32 %v538, 4294901760
    %v540 = vsub.f32 %v538, %v539
    %v541 = vand.u32 %v540, 4294901760
    %542 = vmatprep.subr.mxu0 %v541
    %v543 = vand.u32 %v168, 4294901760
    %v544 = vsub.f32 %v168, %v543
    %v545 = vand.u32 %v544, 4294901760
    %v546 = vsub.f32 %v544, %v545
    %v547 = vand.u32 %v546, 4294901760
    %548 = vmatpush1.msra.mxu0 %v547
    %v549 = vand.u32 %v136, 4294901760
    %v550 = vsub.f32 %v136, %v549
    %v551 = vand.u32 %v550, 4294901760
    %v552 = vsub.f32 %v550, %v551
    %v553 = vand.u32 %v552, 4294901760
    %554 = vmatprep.subr.mxu0 %v553
    %v555 = vand.u32 %v135, 4294901760
    %v556 = vsub.f32 %v135, %v555
    %v557 = vand.u32 %v556, 4294901760
    %v558 = vsub.f32 %v556, %v557
    %v559 = vand.u32 %v558, 4294901760
    %560 = vmatpush1.msra.mxu0 %v559
    %v561 = vand.u32 %v103, 4294901760
    %v562 = vsub.f32 %v103, %v561
    %v563 = vand.u32 %v562, 4294901760
    %v564 = vsub.f32 %v562, %v563
    %v565 = vand.u32 %v564, 4294901760
    %566 = vmatprep.subr.mxu0 %v565
    %v567 = vand.u32 %v102, 4294901760
    %v568 = vsub.f32 %v102, %v567
    %v569 = vand.u32 %v568, 4294901760
    %v570 = vsub.f32 %v568, %v569
    %v571 = vand.u32 %v570, 4294901760
    %572 = vmatpush1.msra.mxu0 %v571
    %573 = vmatprep.subr.mxu0 0.0
    %574 = vmatpush2.msra.mxu0 0.0
    %575 = vmatprep.subr.mxu0 0.0
    %576 = vmatpush2.msra.mxu0 0.0
    %577 = vmatprep.subr.mxu0 0.0
    %578 = vmatpush2.msra.mxu0 0.0
    %579 = vmatprep.subr.mxu0 0.0
    %580 = vmatpush2.msra.mxu0 0.0
    %581 = vmatprep.subr.mxu0 0.0
    %582 = vmatpush2.msra.mxu0 0.0
    %583 = vmatprep.subr.mxu0 0.0
    %584 = vmatpush2.msra.mxu0 0.0
    %585 = vmatprep.subr.mxu0 0.0
    %586 = vmatpush2.msra.mxu0 0.0
    %587 = vmatprep.subr.mxu0 0.0
    %588 = vmatpush2.msra.mxu0 0.0
    %589 = vmatprep.subr.mxu0 0.0
    %590 = vmatpush2.msra.mxu0 0.0
    %591 = vmatprep.subr.mxu0 0.0
    %592 = vmatpush2.msra.mxu0 0.0
    %593 = vmatprep.subr.mxu0 0.0
    %594 = vmatpush2.msra.mxu0 0.0
    %595 = vmatprep.subr.mxu0 0.0
    %596 = vmatpush2.msra.mxu0 0.0
    %597 = vmatprep.subr.mxu0 0.0
    %598 = vmatpush2.msra.mxu0 0.0
    %599 = vmatprep.subr.mxu0 0.0
    %600 = vmatpush2.msra.mxu0 0.0
    %601 = vmatprep.subr.mxu0 0.0
    %602 = vmatpush2.msra.mxu0 0.0
    %603 = vmatprep.subr.mxu0 0.0
    %604 = vmatpush2.msra.mxu0 0.0
    %605 = vmatprep.mubr.f32.mxu0 0.0
    %v606 = vand.u32 %v341, 4294901760
    %607 = vmatmul.mubr.f32.gmra.mxu0 %v606
    %v608 = vpop.f32.mrf.mxu0
    %v609 = vadd.f32 %v436, %v608
    %v610 = vpop.f32.mrf.mxu0
    %v611 = vadd.f32 %v438, %v610
    %612 = vmatprep.mubr.f32.mxu0 0.0
    %v613 = vand.u32 %v344, 4294901760
    %614 = vmatmul.mubr.f32.gmra.mxu0 %v613
    %v615 = vpop.f32.mrf.mxu0
    %v616 = vadd.f32 %v447, %v615
    %v617 = vpop.f32.mrf.mxu0
    %v618 = vadd.f32 %v449, %v617
    %619 = vdwg.mxu0
    %620 = vmatprep.subr.mxu0 0.0
    %621 = vmatpush1.msra.mxu0 0.0
    %622 = vmatprep.subr.mxu0 0.0
    %623 = vmatpush1.msra.mxu0 0.0
    %624 = vmatprep.subr.mxu0 0.0
    %625 = vmatpush1.msra.mxu0 0.0
    %626 = vmatprep.subr.mxu0 0.0
    %627 = vmatpush1.msra.mxu0 0.0
    %628 = vmatprep.subr.mxu0 0.0
    %629 = vmatpush1.msra.mxu0 0.0
    %630 = vmatprep.subr.mxu0 0.0
    %631 = vmatpush1.msra.mxu0 0.0
    %632 = vmatprep.subr.mxu0 0.0
    %633 = vmatpush1.msra.mxu0 0.0
    %v634 = vand.u32 %v334, 4294901760
    %v635 = vsub.f32 %v334, %v634
    %636 = vmatprep.subr.mxu0 %v635
    %v637 = vand.u32 %v333, 4294901760
    %v638 = vsub.f32 %v333, %v637
    %639 = vmatpush1.msra.mxu0 %v638
    %v640 = vand.u32 %v301, 4294901760
    %v641 = vsub.f32 %v301, %v640
    %642 = vmatprep.subr.mxu0 %v641
    %v643 = vand.u32 %v300, 4294901760
    %v644 = vsub.f32 %v300, %v643
    %645 = vmatpush1.msra.mxu0 %v644
    %v646 = vand.u32 %v268, 4294901760
    %v647 = vsub.f32 %v268, %v646
    %648 = vmatprep.subr.mxu0 %v647
    %v649 = vand.u32 %v267, 4294901760
    %v650 = vsub.f32 %v267, %v649
    %651 = vmatpush1.msra.mxu0 %v650
    %v652 = vand.u32 %v235, 4294901760
    %v653 = vsub.f32 %v235, %v652
    %654 = vmatprep.subr.mxu0 %v653
    %v655 = vand.u32 %v234, 4294901760
    %v656 = vsub.f32 %v234, %v655
    %657 = vmatpush1.msra.mxu0 %v656
    %v658 = vand.u32 %v60, 4294901760
    %v659 = vsub.f32 %v60, %v658
    %660 = vmatprep.subr.mxu0 %v659
    %v661 = vand.u32 %v59, 4294901760
    %v662 = vsub.f32 %v59, %v661
    %663 = vmatpush1.msra.mxu0 %v662
    %v664 = vand.u32 %v202, 4294901760
    %v665 = vsub.f32 %v202, %v664
    %666 = vmatprep.subr.mxu0 %v665
    %v667 = vand.u32 %v201, 4294901760
    %v668 = vsub.f32 %v201, %v667
    %669 = vmatpush1.msra.mxu0 %v668
    %v670 = vand.u32 %v169, 4294901760
    %v671 = vsub.f32 %v169, %v670
    %672 = vmatprep.subr.mxu0 %v671
    %v673 = vand.u32 %v168, 4294901760
    %v674 = vsub.f32 %v168, %v673
    %675 = vmatpush1.msra.mxu0 %v674
    %v676 = vand.u32 %v136, 4294901760
    %v677 = vsub.f32 %v136, %v676
    %678 = vmatprep.subr.mxu0 %v677
    %v679 = vand.u32 %v135, 4294901760
    %v680 = vsub.f32 %v135, %v679
    %681 = vmatpush1.msra.mxu0 %v680
    %v682 = vand.u32 %v103, 4294901760
    %v683 = vsub.f32 %v103, %v682
    %684 = vmatprep.subr.mxu0 %v683
    %v685 = vand.u32 %v102, 4294901760
    %v686 = vsub.f32 %v102, %v685
    %687 = vmatpush1.msra.mxu0 %v686
    %688 = vmatprep.subr.mxu0 0.0
    %689 = vmatpush2.msra.mxu0 0.0
    %690 = vmatprep.subr.mxu0 0.0
    %691 = vmatpush2.msra.mxu0 0.0
    %692 = vmatprep.subr.mxu0 0.0
    %693 = vmatpush2.msra.mxu0 0.0
    %694 = vmatprep.subr.mxu0 0.0
    %695 = vmatpush2.msra.mxu0 0.0
    %696 = vmatprep.subr.mxu0 0.0
    %697 = vmatpush2.msra.mxu0 0.0
    %698 = vmatprep.subr.mxu0 0.0
    %699 = vmatpush2.msra.mxu0 0.0
    %700 = vmatprep.subr.mxu0 0.0
    %701 = vmatpush2.msra.mxu0 0.0
    %702 = vmatprep.subr.mxu0 0.0
    %703 = vmatpush2.msra.mxu0 0.0
    %704 = vmatprep.subr.mxu0 0.0
    %705 = vmatpush2.msra.mxu0 0.0
    %706 = vmatprep.subr.mxu0 0.0
    %707 = vmatpush2.msra.mxu0 0.0
    %708 = vmatprep.subr.mxu0 0.0
    %709 = vmatpush2.msra.mxu0 0.0
    %710 = vmatprep.subr.mxu0 0.0
    %711 = vmatpush2.msra.mxu0 0.0
    %712 = vmatprep.subr.mxu0 0.0
    %713 = vmatpush2.msra.mxu0 0.0
    %714 = vmatprep.subr.mxu0 0.0
    %715 = vmatpush2.msra.mxu0 0.0
    %716 = vmatprep.subr.mxu0 0.0
    %717 = vmatpush2.msra.mxu0 0.0
    %718 = vmatprep.subr.mxu0 0.0
    %719 = vmatpush2.msra.mxu0 0.0
    %720 = vmatprep.mubr.f32.mxu0 0.0
    %v721 = vand.u32 %v341, 4294901760
    %v722 = vsub.f32 %v341, %v721
    %723 = vmatmul.mubr.f32.gmra.mxu0 %v722
    %v724 = vpop.f32.mrf.mxu0
    %v725 = vadd.f32 %v609, %v724
    %v726 = vpop.f32.mrf.mxu0
    %v727 = vadd.f32 %v611, %v726
    %728 = vmatprep.mubr.f32.mxu0 0.0
    %v729 = vand.u32 %v344, 4294901760
    %v730 = vsub.f32 %v344, %v729
    %731 = vmatmul.mubr.f32.gmra.mxu0 %v730
    %v732 = vpop.f32.mrf.mxu0
    %v733 = vadd.f32 %v616, %v732
    %v734 = vpop.f32.mrf.mxu0
    %v735 = vadd.f32 %v618, %v734
    %736 = vdwg.mxu0
    %737 = vmatprep.subr.mxu0 0.0
    %738 = vmatpush1.msra.mxu0 0.0
    %739 = vmatprep.subr.mxu0 0.0
    %740 = vmatpush1.msra.mxu0 0.0
    %741 = vmatprep.subr.mxu0 0.0
    %742 = vmatpush1.msra.mxu0 0.0
    %743 = vmatprep.subr.mxu0 0.0
    %744 = vmatpush1.msra.mxu0 0.0
    %745 = vmatprep.subr.mxu0 0.0
    %746 = vmatpush1.msra.mxu0 0.0
    %747 = vmatprep.subr.mxu0 0.0
    %748 = vmatpush1.msra.mxu0 0.0
    %749 = vmatprep.subr.mxu0 0.0
    %750 = vmatpush1.msra.mxu0 0.0
    %v751 = vand.u32 %v334, 4294901760
    %752 = vmatprep.subr.mxu0 %v751
    %v753 = vand.u32 %v333, 4294901760
    %754 = vmatpush1.msra.mxu0 %v753
    %v755 = vand.u32 %v301, 4294901760
    %756 = vmatprep.subr.mxu0 %v755
    %v757 = vand.u32 %v300, 4294901760
    %758 = vmatpush1.msra.mxu0 %v757
    %v759 = vand.u32 %v268, 4294901760
    %760 = vmatprep.subr.mxu0 %v759
    %v761 = vand.u32 %v267, 4294901760
    %762 = vmatpush1.msra.mxu0 %v761
    %v763 = vand.u32 %v235, 4294901760
    %764 = vmatprep.subr.mxu0 %v763
    %v765 = vand.u32 %v234, 4294901760
    %766 = vmatpush1.msra.mxu0 %v765
    %v767 = vand.u32 %v60, 4294901760
    %768 = vmatprep.subr.mxu0 %v767
    %v769 = vand.u32 %v59, 4294901760
    %770 = vmatpush1.msra.mxu0 %v769
    %v771 = vand.u32 %v202, 4294901760
    %772 = vmatprep.subr.mxu0 %v771
    %v773 = vand.u32 %v201, 4294901760
    %774 = vmatpush1.msra.mxu0 %v773
    %v775 = vand.u32 %v169, 4294901760
    %776 = vmatprep.subr.mxu0 %v775
    %v777 = vand.u32 %v168, 4294901760
    %778 = vmatpush1.msra.mxu0 %v777
    %v779 = vand.u32 %v136, 4294901760
    %780 = vmatprep.subr.mxu0 %v779
    %v781 = vand.u32 %v135, 4294901760
    %782 = vmatpush1.msra.mxu0 %v781
    %v783 = vand.u32 %v103, 4294901760
    %784 = vmatprep.subr.mxu0 %v783
    %v785 = vand.u32 %v102, 4294901760
    %786 = vmatpush1.msra.mxu0 %v785
    %787 = vmatprep.subr.mxu0 0.0
    %788 = vmatpush2.msra.mxu0 0.0
    %789 = vmatprep.subr.mxu0 0.0
    %790 = vmatpush2.msra.mxu0 0.0
    %791 = vmatprep.subr.mxu0 0.0
    %792 = vmatpush2.msra.mxu0 0.0
    %793 = vmatprep.subr.mxu0 0.0
    %794 = vmatpush2.msra.mxu0 0.0
    %795 = vmatprep.subr.mxu0 0.0
    %796 = vmatpush2.msra.mxu0 0.0
    %797 = vmatprep.subr.mxu0 0.0
    %798 = vmatpush2.msra.mxu0 0.0
    %799 = vmatprep.subr.mxu0 0.0
    %800 = vmatpush2.msra.mxu0 0.0
    %801 = vmatprep.subr.mxu0 0.0
    %802 = vmatpush2.msra.mxu0 0.0
    %803 = vmatprep.subr.mxu0 0.0
    %804 = vmatpush2.msra.mxu0 0.0
    %805 = vmatprep.subr.mxu0 0.0
    %806 = vmatpush2.msra.mxu0 0.0
    %807 = vmatprep.subr.mxu0 0.0
    %808 = vmatpush2.msra.mxu0 0.0
    %809 = vmatprep.subr.mxu0 0.0
    %810 = vmatpush2.msra.mxu0 0.0
    %811 = vmatprep.subr.mxu0 0.0
    %812 = vmatpush2.msra.mxu0 0.0
    %813 = vmatprep.subr.mxu0 0.0
    %814 = vmatpush2.msra.mxu0 0.0
    %815 = vmatprep.subr.mxu0 0.0
    %816 = vmatpush2.msra.mxu0 0.0
    %817 = vmatprep.subr.mxu0 0.0
    %818 = vmatpush2.msra.mxu0 0.0
    %819 = vmatprep.mubr.f32.mxu0 0.0
    %v820 = vand.u32 %v341, 4294901760
    %v821 = vsub.f32 %v341, %v820
    %v822 = vand.u32 %v821, 4294901760
    %823 = vmatmul.mubr.f32.gmra.mxu0 %v822
    %v824 = vpop.f32.mrf.mxu0
    %v825 = vadd.f32 %v725, %v824
    %v826 = vpop.f32.mrf.mxu0
    %v827 = vadd.f32 %v727, %v826
    %828 = vmatprep.mubr.f32.mxu0 0.0
    %v829 = vand.u32 %v344, 4294901760
    %v830 = vsub.f32 %v344, %v829
    %v831 = vand.u32 %v830, 4294901760
    %832 = vmatmul.mubr.f32.gmra.mxu0 %v831
    %v833 = vpop.f32.mrf.mxu0
    %v834 = vadd.f32 %v733, %v833
    %v835 = vpop.f32.mrf.mxu0
    %v836 = vadd.f32 %v735, %v835
    %837 = vdwg.mxu0
    %838 = vmatprep.subr.mxu0 0.0
    %839 = vmatpush1.msra.mxu0 0.0
    %840 = vmatprep.subr.mxu0 0.0
    %841 = vmatpush1.msra.mxu0 0.0
    %842 = vmatprep.subr.mxu0 0.0
    %843 = vmatpush1.msra.mxu0 0.0
    %844 = vmatprep.subr.mxu0 0.0
    %845 = vmatpush1.msra.mxu0 0.0
    %846 = vmatprep.subr.mxu0 0.0
    %847 = vmatpush1.msra.mxu0 0.0
    %848 = vmatprep.subr.mxu0 0.0
    %849 = vmatpush1.msra.mxu0 0.0
    %850 = vmatprep.subr.mxu0 0.0
    %851 = vmatpush1.msra.mxu0 0.0
    %v852 = vand.u32 %v334, 4294901760
    %v853 = vsub.f32 %v334, %v852
    %v854 = vand.u32 %v853, 4294901760
    %855 = vmatprep.subr.mxu0 %v854
    %v856 = vand.u32 %v333, 4294901760
    %v857 = vsub.f32 %v333, %v856
    %v858 = vand.u32 %v857, 4294901760
    %859 = vmatpush1.msra.mxu0 %v858
    %v860 = vand.u32 %v301, 4294901760
    %v861 = vsub.f32 %v301, %v860
    %v862 = vand.u32 %v861, 4294901760
    %863 = vmatprep.subr.mxu0 %v862
    %v864 = vand.u32 %v300, 4294901760
    %v865 = vsub.f32 %v300, %v864
    %v866 = vand.u32 %v865, 4294901760
    %867 = vmatpush1.msra.mxu0 %v866
    %v868 = vand.u32 %v268, 4294901760
    %v869 = vsub.f32 %v268, %v868
    %v870 = vand.u32 %v869, 4294901760
    %871 = vmatprep.subr.mxu0 %v870
    %v872 = vand.u32 %v267, 4294901760
    %v873 = vsub.f32 %v267, %v872
    %v874 = vand.u32 %v873, 4294901760
    %875 = vmatpush1.msra.mxu0 %v874
    %v876 = vand.u32 %v235, 4294901760
    %v877 = vsub.f32 %v235, %v876
    %v878 = vand.u32 %v877, 4294901760
    %879 = vmatprep.subr.mxu0 %v878
    %v880 = vand.u32 %v234, 4294901760
    %v881 = vsub.f32 %v234, %v880
    %v882 = vand.u32 %v881, 4294901760
    %883 = vmatpush1.msra.mxu0 %v882
    %v884 = vand.u32 %v60, 4294901760
    %v885 = vsub.f32 %v60, %v884
    %v886 = vand.u32 %v885, 4294901760
    %887 = vmatprep.subr.mxu0 %v886
    %v888 = vand.u32 %v59, 4294901760
    %v889 = vsub.f32 %v59, %v888
    %v890 = vand.u32 %v889, 4294901760
    %891 = vmatpush1.msra.mxu0 %v890
    %v892 = vand.u32 %v202, 4294901760
    %v893 = vsub.f32 %v202, %v892
    %v894 = vand.u32 %v893, 4294901760
    %895 = vmatprep.subr.mxu0 %v894
    %v896 = vand.u32 %v201, 4294901760
    %v897 = vsub.f32 %v201, %v896
    %v898 = vand.u32 %v897, 4294901760
    %899 = vmatpush1.msra.mxu0 %v898
    %v900 = vand.u32 %v169, 4294901760
    %v901 = vsub.f32 %v169, %v900
    %v902 = vand.u32 %v901, 4294901760
    %903 = vmatprep.subr.mxu0 %v902
    %v904 = vand.u32 %v168, 4294901760
    %v905 = vsub.f32 %v168, %v904
    %v906 = vand.u32 %v905, 4294901760
    %907 = vmatpush1.msra.mxu0 %v906
    %v908 = vand.u32 %v136, 4294901760
    %v909 = vsub.f32 %v136, %v908
    %v910 = vand.u32 %v909, 4294901760
    %911 = vmatprep.subr.mxu0 %v910
    %v912 = vand.u32 %v135, 4294901760
    %v913 = vsub.f32 %v135, %v912
    %v914 = vand.u32 %v913, 4294901760
    %915 = vmatpush1.msra.mxu0 %v914
    %v916 = vand.u32 %v103, 4294901760
    %v917 = vsub.f32 %v103, %v916
    %v918 = vand.u32 %v917, 4294901760
    %919 = vmatprep.subr.mxu0 %v918
    %v920 = vand.u32 %v102, 4294901760
    %v921 = vsub.f32 %v102, %v920
    %v922 = vand.u32 %v921, 4294901760
    %923 = vmatpush1.msra.mxu0 %v922
    %924 = vmatprep.subr.mxu0 0.0
    %925 = vmatpush2.msra.mxu0 0.0
    %926 = vmatprep.subr.mxu0 0.0
    %927 = vmatpush2.msra.mxu0 0.0
    %928 = vmatprep.subr.mxu0 0.0
    %929 = vmatpush2.msra.mxu0 0.0
    %930 = vmatprep.subr.mxu0 0.0
    %931 = vmatpush2.msra.mxu0 0.0
    %932 = vmatprep.subr.mxu0 0.0
    %933 = vmatpush2.msra.mxu0 0.0
    %934 = vmatprep.subr.mxu0 0.0
    %935 = vmatpush2.msra.mxu0 0.0
    %936 = vmatprep.subr.mxu0 0.0
    %937 = vmatpush2.msra.mxu0 0.0
    %938 = vmatprep.subr.mxu0 0.0
    %939 = vmatpush2.msra.mxu0 0.0
    %940 = vmatprep.subr.mxu0 0.0
    %941 = vmatpush2.msra.mxu0 0.0
    %942 = vmatprep.subr.mxu0 0.0
    %943 = vmatpush2.msra.mxu0 0.0
    %944 = vmatprep.subr.mxu0 0.0
    %945 = vmatpush2.msra.mxu0 0.0
    %946 = vmatprep.subr.mxu0 0.0
    %947 = vmatpush2.msra.mxu0 0.0
    %948 = vmatprep.subr.mxu0 0.0
    %949 = vmatpush2.msra.mxu0 0.0
    %950 = vmatprep.subr.mxu0 0.0
    %951 = vmatpush2.msra.mxu0 0.0
    %952 = vmatprep.subr.mxu0 0.0
    %953 = vmatpush2.msra.mxu0 0.0
    %954 = vmatprep.subr.mxu0 0.0
    %955 = vmatpush2.msra.mxu0 0.0
    %956 = vmatprep.mubr.f32.mxu0 0.0
    %v957 = vand.u32 %v341, 4294901760
    %958 = vmatmul.mubr.f32.gmra.mxu0 %v957
    %v959 = vpop.f32.mrf.mxu0
    %v960 = vadd.f32 %v825, %v959
    %v961 = vpop.f32.mrf.mxu0
    %v962 = vadd.f32 %v827, %v961
    %963 = vmatprep.mubr.f32.mxu0 0.0
    %v964 = vand.u32 %v344, 4294901760
    %965 = vmatmul.mubr.f32.gmra.mxu0 %v964
    %v966 = vpop.f32.mrf.mxu0
    %v967 = vadd.f32 %v834, %v966
    %v968 = vpop.f32.mrf.mxu0
    %v969 = vadd.f32 %v836, %v968
    %970 = vdwg.mxu0
    %971 = vmatprep.subr.mxu0 0.0
    %972 = vmatpush1.msra.mxu0 0.0
    %973 = vmatprep.subr.mxu0 0.0
    %974 = vmatpush1.msra.mxu0 0.0
    %975 = vmatprep.subr.mxu0 0.0
    %976 = vmatpush1.msra.mxu0 0.0
    %977 = vmatprep.subr.mxu0 0.0
    %978 = vmatpush1.msra.mxu0 0.0
    %979 = vmatprep.subr.mxu0 0.0
    %980 = vmatpush1.msra.mxu0 0.0
    %981 = vmatprep.subr.mxu0 0.0
    %982 = vmatpush1.msra.mxu0 0.0
    %983 = vmatprep.subr.mxu0 0.0
    %984 = vmatpush1.msra.mxu0 0.0
    %v985 = vand.u32 %v334, 4294901760
    %986 = vmatprep.subr.mxu0 %v985
    %v987 = vand.u32 %v333, 4294901760
    %988 = vmatpush1.msra.mxu0 %v987
    %v989 = vand.u32 %v301, 4294901760
    %990 = vmatprep.subr.mxu0 %v989
    %v991 = vand.u32 %v300, 4294901760
    %992 = vmatpush1.msra.mxu0 %v991
    %v993 = vand.u32 %v268, 4294901760
    %994 = vmatprep.subr.mxu0 %v993
    %v995 = vand.u32 %v267, 4294901760
    %996 = vmatpush1.msra.mxu0 %v995
    %v997 = vand.u32 %v235, 4294901760
    %998 = vmatprep.subr.mxu0 %v997
    %v999 = vand.u32 %v234, 4294901760
    %1000 = vmatpush1.msra.mxu0 %v999
    %v1001 = vand.u32 %v60, 4294901760
    %1002 = vmatprep.subr.mxu0 %v1001
    %v1003 = vand.u32 %v59, 4294901760
    %1004 = vmatpush1.msra.mxu0 %v1003
    %v1005 = vand.u32 %v202, 4294901760
    %1006 = vmatprep.subr.mxu0 %v1005
    %v1007 = vand.u32 %v201, 4294901760
    %1008 = vmatpush1.msra.mxu0 %v1007
    %v1009 = vand.u32 %v169, 4294901760
    %1010 = vmatprep.subr.mxu0 %v1009
    %v1011 = vand.u32 %v168, 4294901760
    %1012 = vmatpush1.msra.mxu0 %v1011
    %v1013 = vand.u32 %v136, 4294901760
    %1014 = vmatprep.subr.mxu0 %v1013
    %v1015 = vand.u32 %v135, 4294901760
    %1016 = vmatpush1.msra.mxu0 %v1015
    %v1017 = vand.u32 %v103, 4294901760
    %1018 = vmatprep.subr.mxu0 %v1017
    %v1019 = vand.u32 %v102, 4294901760
    %1020 = vmatpush1.msra.mxu0 %v1019
    %1021 = vmatprep.subr.mxu0 0.0
    %1022 = vmatpush2.msra.mxu0 0.0
    %1023 = vmatprep.subr.mxu0 0.0
    %1024 = vmatpush2.msra.mxu0 0.0
    %1025 = vmatprep.subr.mxu0 0.0
    %1026 = vmatpush2.msra.mxu0 0.0
    %1027 = vmatprep.subr.mxu0 0.0
    %1028 = vmatpush2.msra.mxu0 0.0
    %1029 = vmatprep.subr.mxu0 0.0
    %1030 = vmatpush2.msra.mxu0 0.0
    %1031 = vmatprep.subr.mxu0 0.0
    %1032 = vmatpush2.msra.mxu0 0.0
    %1033 = vmatprep.subr.mxu0 0.0
    %1034 = vmatpush2.msra.mxu0 0.0
    %1035 = vmatprep.subr.mxu0 0.0
    %1036 = vmatpush2.msra.mxu0 0.0
    %1037 = vmatprep.subr.mxu0 0.0
    %1038 = vmatpush2.msra.mxu0 0.0
    %1039 = vmatprep.subr.mxu0 0.0
    %1040 = vmatpush2.msra.mxu0 0.0
    %1041 = vmatprep.subr.mxu0 0.0
    %1042 = vmatpush2.msra.mxu0 0.0
    %1043 = vmatprep.subr.mxu0 0.0
    %1044 = vmatpush2.msra.mxu0 0.0
    %1045 = vmatprep.subr.mxu0 0.0
    %1046 = vmatpush2.msra.mxu0 0.0
    %1047 = vmatprep.subr.mxu0 0.0
    %1048 = vmatpush2.msra.mxu0 0.0
    %1049 = vmatprep.subr.mxu0 0.0
    %1050 = vmatpush2.msra.mxu0 0.0
    %1051 = vmatprep.subr.mxu0 0.0
    %1052 = vmatpush2.msra.mxu0 0.0
    %1053 = vmatprep.mubr.f32.mxu0 0.0
    %v1054 = vand.u32 %v341, 4294901760
    %1055 = vmatmul.mubr.f32.gmra.mxu0 %v1054
    %v1056 = vpop.f32.mrf.mxu0
    %v1057 = vadd.f32 %v960, %v1056
    %v1058 = vpop.f32.mrf.mxu0
    %v1059 = vadd.f32 %v962, %v1058
    %1060 = vmatprep.mubr.f32.mxu0 0.0
    %v1061 = vand.u32 %v344, 4294901760
    %1062 = vmatmul.mubr.f32.gmra.mxu0 %v1061
    %v1063 = vpop.f32.mrf.mxu0
    %v1064 = vadd.f32 %v967, %v1063
    %v1065 = vpop.f32.mrf.mxu0
    %v1066 = vadd.f32 %v969, %v1065
    %1067 = vdwg.mxu0
    %1068 = vmatprep.subr.mxu0 0.0
    %1069 = vmatpush1.msra.mxu0 0.0
    %1070 = vmatprep.subr.mxu0 0.0
    %1071 = vmatpush1.msra.mxu0 0.0
    %1072 = vmatprep.subr.mxu0 0.0
    %1073 = vmatpush1.msra.mxu0 0.0
    %1074 = vmatprep.subr.mxu0 0.0
    %1075 = vmatpush1.msra.mxu0 0.0
    %1076 = vmatprep.subr.mxu0 0.0
    %1077 = vmatpush1.msra.mxu0 0.0
    %1078 = vmatprep.subr.mxu0 0.0
    %1079 = vmatpush1.msra.mxu0 0.0
    %1080 = vmatprep.subr.mxu0 0.0
    %1081 = vmatpush1.msra.mxu0 0.0
    %v1082 = vand.u32 %v336, 4294901760
    %1083 = vmatprep.subr.mxu0 %v1082
    %v1084 = vand.u32 %v335, 4294901760
    %1085 = vmatpush1.msra.mxu0 %v1084
    %v1086 = vand.u32 %v303, 4294901760
    %1087 = vmatprep.subr.mxu0 %v1086
    %v1088 = vand.u32 %v302, 4294901760
    %1089 = vmatpush1.msra.mxu0 %v1088
    %v1090 = vand.u32 %v270, 4294901760
    %1091 = vmatprep.subr.mxu0 %v1090
    %v1092 = vand.u32 %v269, 4294901760
    %1093 = vmatpush1.msra.mxu0 %v1092
    %v1094 = vand.u32 %v237, 4294901760
    %1095 = vmatprep.subr.mxu0 %v1094
    %v1096 = vand.u32 %v236, 4294901760
    %1097 = vmatpush1.msra.mxu0 %v1096
    %v1098 = vand.u32 %v62, 4294901760
    %1099 = vmatprep.subr.mxu0 %v1098
    %v1100 = vand.u32 %v61, 4294901760
    %1101 = vmatpush1.msra.mxu0 %v1100
    %v1102 = vand.u32 %v204, 4294901760
    %1103 = vmatprep.subr.mxu0 %v1102
    %v1104 = vand.u32 %v203, 4294901760
    %1105 = vmatpush1.msra.mxu0 %v1104
    %v1106 = vand.u32 %v171, 4294901760
    %1107 = vmatprep.subr.mxu0 %v1106
    %v1108 = vand.u32 %v170, 4294901760
    %1109 = vmatpush1.msra.mxu0 %v1108
    %v1110 = vand.u32 %v138, 4294901760
    %1111 = vmatprep.subr.mxu0 %v1110
    %v1112 = vand.u32 %v137, 4294901760
    %1113 = vmatpush1.msra.mxu0 %v1112
    %v1114 = vand.u32 %v105, 4294901760
    %1115 = vmatprep.subr.mxu0 %v1114
    %v1116 = vand.u32 %v104, 4294901760
    %1117 = vmatpush1.msra.mxu0 %v1116
    %1118 = vmatprep.subr.mxu0 0.0
    %1119 = vmatpush2.msra.mxu0 0.0
    %1120 = vmatprep.subr.mxu0 0.0
    %1121 = vmatpush2.msra.mxu0 0.0
    %1122 = vmatprep.subr.mxu0 0.0
    %1123 = vmatpush2.msra.mxu0 0.0
    %1124 = vmatprep.subr.mxu0 0.0
    %1125 = vmatpush2.msra.mxu0 0.0
    %1126 = vmatprep.subr.mxu0 0.0
    %1127 = vmatpush2.msra.mxu0 0.0
    %1128 = vmatprep.subr.mxu0 0.0
    %1129 = vmatpush2.msra.mxu0 0.0
    %1130 = vmatprep.subr.mxu0 0.0
    %1131 = vmatpush2.msra.mxu0 0.0
    %1132 = vmatprep.subr.mxu0 0.0
    %1133 = vmatpush2.msra.mxu0 0.0
    %1134 = vmatprep.subr.mxu0 0.0
    %1135 = vmatpush2.msra.mxu0 0.0
    %1136 = vmatprep.subr.mxu0 0.0
    %1137 = vmatpush2.msra.mxu0 0.0
    %1138 = vmatprep.subr.mxu0 0.0
    %1139 = vmatpush2.msra.mxu0 0.0
    %1140 = vmatprep.subr.mxu0 0.0
    %1141 = vmatpush2.msra.mxu0 0.0
    %1142 = vmatprep.subr.mxu0 0.0
    %1143 = vmatpush2.msra.mxu0 0.0
    %1144 = vmatprep.subr.mxu0 0.0
    %1145 = vmatpush2.msra.mxu0 0.0
    %1146 = vmatprep.subr.mxu0 0.0
    %1147 = vmatpush2.msra.mxu0 0.0
    %1148 = vmatprep.subr.mxu0 0.0
    %1149 = vmatpush2.msra.mxu0 0.0
    %1150 = vmatprep.mubr.f32.mxu0 0.0
    %v1151 = vand.u32 %v341, 4294901760
    %v1152 = vsub.f32 %v341, %v1151
    %v1153 = vand.u32 %v1152, 4294901760
    %v1154 = vsub.f32 %v1152, %v1153
    %v1155 = vand.u32 %v1154, 4294901760
    %1156 = vmatmul.mubr.f32.gmra.mxu0 %v1155
    %v1157 = vpop.f32.mrf.mxu0
    %v1158 = vadd.f32 0.0, %v1157
    %v1159 = vpop.f32.mrf.mxu0
    %v1160 = vadd.f32 0.0, %v1159
    %1161 = vmatprep.mubr.f32.mxu0 0.0
    %v1162 = vand.u32 %v344, 4294901760
    %v1163 = vsub.f32 %v344, %v1162
    %v1164 = vand.u32 %v1163, 4294901760
    %v1165 = vsub.f32 %v1163, %v1164
    %v1166 = vand.u32 %v1165, 4294901760
    %1167 = vmatmul.mubr.f32.gmra.mxu0 %v1166
    %v1168 = vpop.f32.mrf.mxu0
    %v1169 = vadd.f32 0.0, %v1168
    %v1170 = vpop.f32.mrf.mxu0
    %v1171 = vadd.f32 0.0, %v1170
    %1172 = vdwg.mxu0
    %1173 = vmatprep.subr.mxu0 0.0
    %1174 = vmatpush1.msra.mxu0 0.0
    %1175 = vmatprep.subr.mxu0 0.0
    %1176 = vmatpush1.msra.mxu0 0.0
    %1177 = vmatprep.subr.mxu0 0.0
    %1178 = vmatpush1.msra.mxu0 0.0
    %1179 = vmatprep.subr.mxu0 0.0
    %1180 = vmatpush1.msra.mxu0 0.0
    %1181 = vmatprep.subr.mxu0 0.0
    %1182 = vmatpush1.msra.mxu0 0.0
    %1183 = vmatprep.subr.mxu0 0.0
    %1184 = vmatpush1.msra.mxu0 0.0
    %1185 = vmatprep.subr.mxu0 0.0
    %1186 = vmatpush1.msra.mxu0 0.0
    %v1187 = vand.u32 %v336, 4294901760
    %v1188 = vsub.f32 %v336, %v1187
    %v1189 = vand.u32 %v1188, 4294901760
    %v1190 = vsub.f32 %v1188, %v1189
    %v1191 = vand.u32 %v1190, 4294901760
    %1192 = vmatprep.subr.mxu0 %v1191
    %v1193 = vand.u32 %v335, 4294901760
    %v1194 = vsub.f32 %v335, %v1193
    %v1195 = vand.u32 %v1194, 4294901760
    %v1196 = vsub.f32 %v1194, %v1195
    %v1197 = vand.u32 %v1196, 4294901760
    %1198 = vmatpush1.msra.mxu0 %v1197
    %v1199 = vand.u32 %v303, 4294901760
    %v1200 = vsub.f32 %v303, %v1199
    %v1201 = vand.u32 %v1200, 4294901760
    %v1202 = vsub.f32 %v1200, %v1201
    %v1203 = vand.u32 %v1202, 4294901760
    %1204 = vmatprep.subr.mxu0 %v1203
    %v1205 = vand.u32 %v302, 4294901760
    %v1206 = vsub.f32 %v302, %v1205
    %v1207 = vand.u32 %v1206, 4294901760
    %v1208 = vsub.f32 %v1206, %v1207
    %v1209 = vand.u32 %v1208, 4294901760
    %1210 = vmatpush1.msra.mxu0 %v1209
    %v1211 = vand.u32 %v270, 4294901760
    %v1212 = vsub.f32 %v270, %v1211
    %v1213 = vand.u32 %v1212, 4294901760
    %v1214 = vsub.f32 %v1212, %v1213
    %v1215 = vand.u32 %v1214, 4294901760
    %1216 = vmatprep.subr.mxu0 %v1215
    %v1217 = vand.u32 %v269, 4294901760
    %v1218 = vsub.f32 %v269, %v1217
    %v1219 = vand.u32 %v1218, 4294901760
    %v1220 = vsub.f32 %v1218, %v1219
    %v1221 = vand.u32 %v1220, 4294901760
    %1222 = vmatpush1.msra.mxu0 %v1221
    %v1223 = vand.u32 %v237, 4294901760
    %v1224 = vsub.f32 %v237, %v1223
    %v1225 = vand.u32 %v1224, 4294901760
    %v1226 = vsub.f32 %v1224, %v1225
    %v1227 = vand.u32 %v1226, 4294901760
    %1228 = vmatprep.subr.mxu0 %v1227
    %v1229 = vand.u32 %v236, 4294901760
    %v1230 = vsub.f32 %v236, %v1229
    %v1231 = vand.u32 %v1230, 4294901760
    %v1232 = vsub.f32 %v1230, %v1231
    %v1233 = vand.u32 %v1232, 4294901760
    %1234 = vmatpush1.msra.mxu0 %v1233
    %v1235 = vand.u32 %v62, 4294901760
    %v1236 = vsub.f32 %v62, %v1235
    %v1237 = vand.u32 %v1236, 4294901760
    %v1238 = vsub.f32 %v1236, %v1237
    %v1239 = vand.u32 %v1238, 4294901760
    %1240 = vmatprep.subr.mxu0 %v1239
    %v1241 = vand.u32 %v61, 4294901760
    %v1242 = vsub.f32 %v61, %v1241
    %v1243 = vand.u32 %v1242, 4294901760
    %v1244 = vsub.f32 %v1242, %v1243
    %v1245 = vand.u32 %v1244, 4294901760
    %1246 = vmatpush1.msra.mxu0 %v1245
    %v1247 = vand.u32 %v204, 4294901760
    %v1248 = vsub.f32 %v204, %v1247
    %v1249 = vand.u32 %v1248, 4294901760
    %v1250 = vsub.f32 %v1248, %v1249
    %v1251 = vand.u32 %v1250, 4294901760
    %1252 = vmatprep.subr.mxu0 %v1251
    %v1253 = vand.u32 %v203, 4294901760
    %v1254 = vsub.f32 %v203, %v1253
    %v1255 = vand.u32 %v1254, 4294901760
    %v1256 = vsub.f32 %v1254, %v1255
    %v1257 = vand.u32 %v1256, 4294901760
    %1258 = vmatpush1.msra.mxu0 %v1257
    %v1259 = vand.u32 %v171, 4294901760
    %v1260 = vsub.f32 %v171, %v1259
    %v1261 = vand.u32 %v1260, 4294901760
    %v1262 = vsub.f32 %v1260, %v1261
    %v1263 = vand.u32 %v1262, 4294901760
    %1264 = vmatprep.subr.mxu0 %v1263
    %v1265 = vand.u32 %v170, 4294901760
    %v1266 = vsub.f32 %v170, %v1265
    %v1267 = vand.u32 %v1266, 4294901760
    %v1268 = vsub.f32 %v1266, %v1267
    %v1269 = vand.u32 %v1268, 4294901760
    %1270 = vmatpush1.msra.mxu0 %v1269
    %v1271 = vand.u32 %v138, 4294901760
    %v1272 = vsub.f32 %v138, %v1271
    %v1273 = vand.u32 %v1272, 4294901760
    %v1274 = vsub.f32 %v1272, %v1273
    %v1275 = vand.u32 %v1274, 4294901760
    %1276 = vmatprep.subr.mxu0 %v1275
    %v1277 = vand.u32 %v137, 4294901760
    %v1278 = vsub.f32 %v137, %v1277
    %v1279 = vand.u32 %v1278, 4294901760
    %v1280 = vsub.f32 %v1278, %v1279
    %v1281 = vand.u32 %v1280, 4294901760
    %1282 = vmatpush1.msra.mxu0 %v1281
    %v1283 = vand.u32 %v105, 4294901760
    %v1284 = vsub.f32 %v105, %v1283
    %v1285 = vand.u32 %v1284, 4294901760
    %v1286 = vsub.f32 %v1284, %v1285
    %v1287 = vand.u32 %v1286, 4294901760
    %1288 = vmatprep.subr.mxu0 %v1287
    %v1289 = vand.u32 %v104, 4294901760
    %v1290 = vsub.f32 %v104, %v1289
    %v1291 = vand.u32 %v1290, 4294901760
    %v1292 = vsub.f32 %v1290, %v1291
    %v1293 = vand.u32 %v1292, 4294901760
    %1294 = vmatpush1.msra.mxu0 %v1293
    %1295 = vmatprep.subr.mxu0 0.0
    %1296 = vmatpush2.msra.mxu0 0.0
    %1297 = vmatprep.subr.mxu0 0.0
    %1298 = vmatpush2.msra.mxu0 0.0
    %1299 = vmatprep.subr.mxu0 0.0
    %1300 = vmatpush2.msra.mxu0 0.0
    %1301 = vmatprep.subr.mxu0 0.0
    %1302 = vmatpush2.msra.mxu0 0.0
    %1303 = vmatprep.subr.mxu0 0.0
    %1304 = vmatpush2.msra.mxu0 0.0
    %1305 = vmatprep.subr.mxu0 0.0
    %1306 = vmatpush2.msra.mxu0 0.0
    %1307 = vmatprep.subr.mxu0 0.0
    %1308 = vmatpush2.msra.mxu0 0.0
    %1309 = vmatprep.subr.mxu0 0.0
    %1310 = vmatpush2.msra.mxu0 0.0
    %1311 = vmatprep.subr.mxu0 0.0
    %1312 = vmatpush2.msra.mxu0 0.0
    %1313 = vmatprep.subr.mxu0 0.0
    %1314 = vmatpush2.msra.mxu0 0.0
    %1315 = vmatprep.subr.mxu0 0.0
    %1316 = vmatpush2.msra.mxu0 0.0
    %1317 = vmatprep.subr.mxu0 0.0
    %1318 = vmatpush2.msra.mxu0 0.0
    %1319 = vmatprep.subr.mxu0 0.0
    %1320 = vmatpush2.msra.mxu0 0.0
    %1321 = vmatprep.subr.mxu0 0.0
    %1322 = vmatpush2.msra.mxu0 0.0
    %1323 = vmatprep.subr.mxu0 0.0
    %1324 = vmatpush2.msra.mxu0 0.0
    %1325 = vmatprep.subr.mxu0 0.0
    %1326 = vmatpush2.msra.mxu0 0.0
    %1327 = vmatprep.mubr.f32.mxu0 0.0
    %v1328 = vand.u32 %v341, 4294901760
    %1329 = vmatmul.mubr.f32.gmra.mxu0 %v1328
    %v1330 = vpop.f32.mrf.mxu0
    %v1331 = vadd.f32 %v1158, %v1330
    %v1332 = vpop.f32.mrf.mxu0
    %v1333 = vadd.f32 %v1160, %v1332
    %1334 = vmatprep.mubr.f32.mxu0 0.0
    %v1335 = vand.u32 %v344, 4294901760
    %1336 = vmatmul.mubr.f32.gmra.mxu0 %v1335
    %v1337 = vpop.f32.mrf.mxu0
    %v1338 = vadd.f32 %v1169, %v1337
    %v1339 = vpop.f32.mrf.mxu0
    %v1340 = vadd.f32 %v1171, %v1339
    %1341 = vdwg.mxu0
    %1342 = vmatprep.subr.mxu0 0.0
    %1343 = vmatpush1.msra.mxu0 0.0
    %1344 = vmatprep.subr.mxu0 0.0
    %1345 = vmatpush1.msra.mxu0 0.0
    %1346 = vmatprep.subr.mxu0 0.0
    %1347 = vmatpush1.msra.mxu0 0.0
    %1348 = vmatprep.subr.mxu0 0.0
    %1349 = vmatpush1.msra.mxu0 0.0
    %1350 = vmatprep.subr.mxu0 0.0
    %1351 = vmatpush1.msra.mxu0 0.0
    %1352 = vmatprep.subr.mxu0 0.0
    %1353 = vmatpush1.msra.mxu0 0.0
    %1354 = vmatprep.subr.mxu0 0.0
    %1355 = vmatpush1.msra.mxu0 0.0
    %v1356 = vand.u32 %v336, 4294901760
    %v1357 = vsub.f32 %v336, %v1356
    %1358 = vmatprep.subr.mxu0 %v1357
    %v1359 = vand.u32 %v335, 4294901760
    %v1360 = vsub.f32 %v335, %v1359
    %1361 = vmatpush1.msra.mxu0 %v1360
    %v1362 = vand.u32 %v303, 4294901760
    %v1363 = vsub.f32 %v303, %v1362
    %1364 = vmatprep.subr.mxu0 %v1363
    %v1365 = vand.u32 %v302, 4294901760
    %v1366 = vsub.f32 %v302, %v1365
    %1367 = vmatpush1.msra.mxu0 %v1366
    %v1368 = vand.u32 %v270, 4294901760
    %v1369 = vsub.f32 %v270, %v1368
    %1370 = vmatprep.subr.mxu0 %v1369
    %v1371 = vand.u32 %v269, 4294901760
    %v1372 = vsub.f32 %v269, %v1371
    %1373 = vmatpush1.msra.mxu0 %v1372
    %v1374 = vand.u32 %v237, 4294901760
    %v1375 = vsub.f32 %v237, %v1374
    %1376 = vmatprep.subr.mxu0 %v1375
    %v1377 = vand.u32 %v236, 4294901760
    %v1378 = vsub.f32 %v236, %v1377
    %1379 = vmatpush1.msra.mxu0 %v1378
    %v1380 = vand.u32 %v62, 4294901760
    %v1381 = vsub.f32 %v62, %v1380
    %1382 = vmatprep.subr.mxu0 %v1381
    %v1383 = vand.u32 %v61, 4294901760
    %v1384 = vsub.f32 %v61, %v1383
    %1385 = vmatpush1.msra.mxu0 %v1384
    %v1386 = vand.u32 %v204, 4294901760
    %v1387 = vsub.f32 %v204, %v1386
    %1388 = vmatprep.subr.mxu0 %v1387
    %v1389 = vand.u32 %v203, 4294901760
    %v1390 = vsub.f32 %v203, %v1389
    %1391 = vmatpush1.msra.mxu0 %v1390
    %v1392 = vand.u32 %v171, 4294901760
    %v1393 = vsub.f32 %v171, %v1392
    %1394 = vmatprep.subr.mxu0 %v1393
    %v1395 = vand.u32 %v170, 4294901760
    %v1396 = vsub.f32 %v170, %v1395
    %1397 = vmatpush1.msra.mxu0 %v1396
    %v1398 = vand.u32 %v138, 4294901760
    %v1399 = vsub.f32 %v138, %v1398
    %1400 = vmatprep.subr.mxu0 %v1399
    %v1401 = vand.u32 %v137, 4294901760
    %v1402 = vsub.f32 %v137, %v1401
    %1403 = vmatpush1.msra.mxu0 %v1402
    %v1404 = vand.u32 %v105, 4294901760
    %v1405 = vsub.f32 %v105, %v1404
    %1406 = vmatprep.subr.mxu0 %v1405
    %v1407 = vand.u32 %v104, 4294901760
    %v1408 = vsub.f32 %v104, %v1407
    %1409 = vmatpush1.msra.mxu0 %v1408
    %1410 = vmatprep.subr.mxu0 0.0
    %1411 = vmatpush2.msra.mxu0 0.0
    %1412 = vmatprep.subr.mxu0 0.0
    %1413 = vmatpush2.msra.mxu0 0.0
    %1414 = vmatprep.subr.mxu0 0.0
    %1415 = vmatpush2.msra.mxu0 0.0
    %1416 = vmatprep.subr.mxu0 0.0
    %1417 = vmatpush2.msra.mxu0 0.0
    %1418 = vmatprep.subr.mxu0 0.0
    %1419 = vmatpush2.msra.mxu0 0.0
    %1420 = vmatprep.subr.mxu0 0.0
    %1421 = vmatpush2.msra.mxu0 0.0
    %1422 = vmatprep.subr.mxu0 0.0
    %1423 = vmatpush2.msra.mxu0 0.0
    %1424 = vmatprep.subr.mxu0 0.0
    %1425 = vmatpush2.msra.mxu0 0.0
    %1426 = vmatprep.subr.mxu0 0.0
    %1427 = vmatpush2.msra.mxu0 0.0
    %1428 = vmatprep.subr.mxu0 0.0
    %1429 = vmatpush2.msra.mxu0 0.0
    %1430 = vmatprep.subr.mxu0 0.0
    %1431 = vmatpush2.msra.mxu0 0.0
    %1432 = vmatprep.subr.mxu0 0.0
    %1433 = vmatpush2.msra.mxu0 0.0
    %1434 = vmatprep.subr.mxu0 0.0
    %1435 = vmatpush2.msra.mxu0 0.0
    %1436 = vmatprep.subr.mxu0 0.0
    %1437 = vmatpush2.msra.mxu0 0.0
    %1438 = vmatprep.subr.mxu0 0.0
    %1439 = vmatpush2.msra.mxu0 0.0
    %1440 = vmatprep.subr.mxu0 0.0
    %1441 = vmatpush2.msra.mxu0 0.0
    %1442 = vmatprep.mubr.f32.mxu0 0.0
    %v1443 = vand.u32 %v341, 4294901760
    %v1444 = vsub.f32 %v341, %v1443
    %1445 = vmatmul.mubr.f32.gmra.mxu0 %v1444
    %v1446 = vpop.f32.mrf.mxu0
    %v1447 = vadd.f32 %v1331, %v1446
    %v1448 = vpop.f32.mrf.mxu0
    %v1449 = vadd.f32 %v1333, %v1448
    %1450 = vmatprep.mubr.f32.mxu0 0.0
    %v1451 = vand.u32 %v344, 4294901760
    %v1452 = vsub.f32 %v344, %v1451
    %1453 = vmatmul.mubr.f32.gmra.mxu0 %v1452
    %v1454 = vpop.f32.mrf.mxu0
    %v1455 = vadd.f32 %v1338, %v1454
    %v1456 = vpop.f32.mrf.mxu0
    %v1457 = vadd.f32 %v1340, %v1456
    %1458 = vdwg.mxu0
    %1459 = vmatprep.subr.mxu0 0.0
    %1460 = vmatpush1.msra.mxu0 0.0
    %1461 = vmatprep.subr.mxu0 0.0
    %1462 = vmatpush1.msra.mxu0 0.0
    %1463 = vmatprep.subr.mxu0 0.0
    %1464 = vmatpush1.msra.mxu0 0.0
    %1465 = vmatprep.subr.mxu0 0.0
    %1466 = vmatpush1.msra.mxu0 0.0
    %1467 = vmatprep.subr.mxu0 0.0
    %1468 = vmatpush1.msra.mxu0 0.0
    %1469 = vmatprep.subr.mxu0 0.0
    %1470 = vmatpush1.msra.mxu0 0.0
    %1471 = vmatprep.subr.mxu0 0.0
    %1472 = vmatpush1.msra.mxu0 0.0
    %v1473 = vand.u32 %v336, 4294901760
    %1474 = vmatprep.subr.mxu0 %v1473
    %v1475 = vand.u32 %v335, 4294901760
    %1476 = vmatpush1.msra.mxu0 %v1475
    %v1477 = vand.u32 %v303, 4294901760
    %1478 = vmatprep.subr.mxu0 %v1477
    %v1479 = vand.u32 %v302, 4294901760
    %1480 = vmatpush1.msra.mxu0 %v1479
    %v1481 = vand.u32 %v270, 4294901760
    %1482 = vmatprep.subr.mxu0 %v1481
    %v1483 = vand.u32 %v269, 4294901760
    %1484 = vmatpush1.msra.mxu0 %v1483
    %v1485 = vand.u32 %v237, 4294901760
    %1486 = vmatprep.subr.mxu0 %v1485
    %v1487 = vand.u32 %v236, 4294901760
    %1488 = vmatpush1.msra.mxu0 %v1487
    %v1489 = vand.u32 %v62, 4294901760
    %1490 = vmatprep.subr.mxu0 %v1489
    %v1491 = vand.u32 %v61, 4294901760
    %1492 = vmatpush1.msra.mxu0 %v1491
    %v1493 = vand.u32 %v204, 4294901760
    %1494 = vmatprep.subr.mxu0 %v1493
    %v1495 = vand.u32 %v203, 4294901760
    %1496 = vmatpush1.msra.mxu0 %v1495
    %v1497 = vand.u32 %v171, 4294901760
    %1498 = vmatprep.subr.mxu0 %v1497
    %v1499 = vand.u32 %v170, 4294901760
    %1500 = vmatpush1.msra.mxu0 %v1499
    %v1501 = vand.u32 %v138, 4294901760
    %1502 = vmatprep.subr.mxu0 %v1501
    %v1503 = vand.u32 %v137, 4294901760
    %1504 = vmatpush1.msra.mxu0 %v1503
    %v1505 = vand.u32 %v105, 4294901760
    %1506 = vmatprep.subr.mxu0 %v1505
    %v1507 = vand.u32 %v104, 4294901760
    %1508 = vmatpush1.msra.mxu0 %v1507
    %1509 = vmatprep.subr.mxu0 0.0
    %1510 = vmatpush2.msra.mxu0 0.0
    %1511 = vmatprep.subr.mxu0 0.0
    %1512 = vmatpush2.msra.mxu0 0.0
    %1513 = vmatprep.subr.mxu0 0.0
    %1514 = vmatpush2.msra.mxu0 0.0
    %1515 = vmatprep.subr.mxu0 0.0
    %1516 = vmatpush2.msra.mxu0 0.0
    %1517 = vmatprep.subr.mxu0 0.0
    %1518 = vmatpush2.msra.mxu0 0.0
    %1519 = vmatprep.subr.mxu0 0.0
    %1520 = vmatpush2.msra.mxu0 0.0
    %1521 = vmatprep.subr.mxu0 0.0
    %1522 = vmatpush2.msra.mxu0 0.0
    %1523 = vmatprep.subr.mxu0 0.0
    %1524 = vmatpush2.msra.mxu0 0.0
    %1525 = vmatprep.subr.mxu0 0.0
    %1526 = vmatpush2.msra.mxu0 0.0
    %1527 = vmatprep.subr.mxu0 0.0
    %1528 = vmatpush2.msra.mxu0 0.0
    %1529 = vmatprep.subr.mxu0 0.0
    %1530 = vmatpush2.msra.mxu0 0.0
    %1531 = vmatprep.subr.mxu0 0.0
    %1532 = vmatpush2.msra.mxu0 0.0
    %1533 = vmatprep.subr.mxu0 0.0
    %1534 = vmatpush2.msra.mxu0 0.0
    %1535 = vmatprep.subr.mxu0 0.0
    %1536 = vmatpush2.msra.mxu0 0.0
    %1537 = vmatprep.subr.mxu0 0.0
    %1538 = vmatpush2.msra.mxu0 0.0
    %1539 = vmatprep.subr.mxu0 0.0
    %1540 = vmatpush2.msra.mxu0 0.0
    %1541 = vmatprep.mubr.f32.mxu0 0.0
    %v1542 = vand.u32 %v341, 4294901760
    %v1543 = vsub.f32 %v341, %v1542
    %v1544 = vand.u32 %v1543, 4294901760
    %1545 = vmatmul.mubr.f32.gmra.mxu0 %v1544
    %v1546 = vpop.f32.mrf.mxu0
    %v1547 = vadd.f32 %v1447, %v1546
    %v1548 = vpop.f32.mrf.mxu0
    %v1549 = vadd.f32 %v1449, %v1548
    %1550 = vmatprep.mubr.f32.mxu0 0.0
    %v1551 = vand.u32 %v344, 4294901760
    %v1552 = vsub.f32 %v344, %v1551
    %v1553 = vand.u32 %v1552, 4294901760
    %1554 = vmatmul.mubr.f32.gmra.mxu0 %v1553
    %v1555 = vpop.f32.mrf.mxu0
    %v1556 = vadd.f32 %v1455, %v1555
    %v1557 = vpop.f32.mrf.mxu0
    %v1558 = vadd.f32 %v1457, %v1557
    %1559 = vdwg.mxu0
    %1560 = vmatprep.subr.mxu0 0.0
    %1561 = vmatpush1.msra.mxu0 0.0
    %1562 = vmatprep.subr.mxu0 0.0
    %1563 = vmatpush1.msra.mxu0 0.0
    %1564 = vmatprep.subr.mxu0 0.0
    %1565 = vmatpush1.msra.mxu0 0.0
    %1566 = vmatprep.subr.mxu0 0.0
    %1567 = vmatpush1.msra.mxu0 0.0
    %1568 = vmatprep.subr.mxu0 0.0
    %1569 = vmatpush1.msra.mxu0 0.0
    %1570 = vmatprep.subr.mxu0 0.0
    %1571 = vmatpush1.msra.mxu0 0.0
    %1572 = vmatprep.subr.mxu0 0.0
    %1573 = vmatpush1.msra.mxu0 0.0
    %v1574 = vand.u32 %v336, 4294901760
    %v1575 = vsub.f32 %v336, %v1574
    %v1576 = vand.u32 %v1575, 4294901760
    %1577 = vmatprep.subr.mxu0 %v1576
    %v1578 = vand.u32 %v335, 4294901760
    %v1579 = vsub.f32 %v335, %v1578
    %v1580 = vand.u32 %v1579, 4294901760
    %1581 = vmatpush1.msra.mxu0 %v1580
    %v1582 = vand.u32 %v303, 4294901760
    %v1583 = vsub.f32 %v303, %v1582
    %v1584 = vand.u32 %v1583, 4294901760
    %1585 = vmatprep.subr.mxu0 %v1584
    %v1586 = vand.u32 %v302, 4294901760
    %v1587 = vsub.f32 %v302, %v1586
    %v1588 = vand.u32 %v1587, 4294901760
    %1589 = vmatpush1.msra.mxu0 %v1588
    %v1590 = vand.u32 %v270, 4294901760
    %v1591 = vsub.f32 %v270, %v1590
    %v1592 = vand.u32 %v1591, 4294901760
    %1593 = vmatprep.subr.mxu0 %v1592
    %v1594 = vand.u32 %v269, 4294901760
    %v1595 = vsub.f32 %v269, %v1594
    %v1596 = vand.u32 %v1595, 4294901760
    %1597 = vmatpush1.msra.mxu0 %v1596
    %v1598 = vand.u32 %v237, 4294901760
    %v1599 = vsub.f32 %v237, %v1598
    %v1600 = vand.u32 %v1599, 4294901760
    %1601 = vmatprep.subr.mxu0 %v1600
    %v1602 = vand.u32 %v236, 4294901760
    %v1603 = vsub.f32 %v236, %v1602
    %v1604 = vand.u32 %v1603, 4294901760
    %1605 = vmatpush1.msra.mxu0 %v1604
    %v1606 = vand.u32 %v62, 4294901760
    %v1607 = vsub.f32 %v62, %v1606
    %v1608 = vand.u32 %v1607, 4294901760
    %1609 = vmatprep.subr.mxu0 %v1608
    %v1610 = vand.u32 %v61, 4294901760
    %v1611 = vsub.f32 %v61, %v1610
    %v1612 = vand.u32 %v1611, 4294901760
    %1613 = vmatpush1.msra.mxu0 %v1612
    %v1614 = vand.u32 %v204, 4294901760
    %v1615 = vsub.f32 %v204, %v1614
    %v1616 = vand.u32 %v1615, 4294901760
    %1617 = vmatprep.subr.mxu0 %v1616
    %v1618 = vand.u32 %v203, 4294901760
    %v1619 = vsub.f32 %v203, %v1618
    %v1620 = vand.u32 %v1619, 4294901760
    %1621 = vmatpush1.msra.mxu0 %v1620
    %v1622 = vand.u32 %v171, 4294901760
    %v1623 = vsub.f32 %v171, %v1622
    %v1624 = vand.u32 %v1623, 4294901760
    %1625 = vmatprep.subr.mxu0 %v1624
    %v1626 = vand.u32 %v170, 4294901760
    %v1627 = vsub.f32 %v170, %v1626
    %v1628 = vand.u32 %v1627, 4294901760
    %1629 = vmatpush1.msra.mxu0 %v1628
    %v1630 = vand.u32 %v138, 4294901760
    %v1631 = vsub.f32 %v138, %v1630
    %v1632 = vand.u32 %v1631, 4294901760
    %1633 = vmatprep.subr.mxu0 %v1632
    %v1634 = vand.u32 %v137, 4294901760
    %v1635 = vsub.f32 %v137, %v1634
    %v1636 = vand.u32 %v1635, 4294901760
    %1637 = vmatpush1.msra.mxu0 %v1636
    %v1638 = vand.u32 %v105, 4294901760
    %v1639 = vsub.f32 %v105, %v1638
    %v1640 = vand.u32 %v1639, 4294901760
    %1641 = vmatprep.subr.mxu0 %v1640
    %v1642 = vand.u32 %v104, 4294901760
    %v1643 = vsub.f32 %v104, %v1642
    %v1644 = vand.u32 %v1643, 4294901760
    %1645 = vmatpush1.msra.mxu0 %v1644
    %1646 = vmatprep.subr.mxu0 0.0
    %1647 = vmatpush2.msra.mxu0 0.0
    %1648 = vmatprep.subr.mxu0 0.0
    %1649 = vmatpush2.msra.mxu0 0.0
    %1650 = vmatprep.subr.mxu0 0.0
    %1651 = vmatpush2.msra.mxu0 0.0
    %1652 = vmatprep.subr.mxu0 0.0
    %1653 = vmatpush2.msra.mxu0 0.0
    %1654 = vmatprep.subr.mxu0 0.0
    %1655 = vmatpush2.msra.mxu0 0.0
    %1656 = vmatprep.subr.mxu0 0.0
    %1657 = vmatpush2.msra.mxu0 0.0
    %1658 = vmatprep.subr.mxu0 0.0
    %1659 = vmatpush2.msra.mxu0 0.0
    %1660 = vmatprep.subr.mxu0 0.0
    %1661 = vmatpush2.msra.mxu0 0.0
    %1662 = vmatprep.subr.mxu0 0.0
    %1663 = vmatpush2.msra.mxu0 0.0
    %1664 = vmatprep.subr.mxu0 0.0
    %1665 = vmatpush2.msra.mxu0 0.0
    %1666 = vmatprep.subr.mxu0 0.0
    %1667 = vmatpush2.msra.mxu0 0.0
    %1668 = vmatprep.subr.mxu0 0.0
    %1669 = vmatpush2.msra.mxu0 0.0
    %1670 = vmatprep.subr.mxu0 0.0
    %1671 = vmatpush2.msra.mxu0 0.0
    %1672 = vmatprep.subr.mxu0 0.0
    %1673 = vmatpush2.msra.mxu0 0.0
    %1674 = vmatprep.subr.mxu0 0.0
    %1675 = vmatpush2.msra.mxu0 0.0
    %1676 = vmatprep.subr.mxu0 0.0
    %1677 = vmatpush2.msra.mxu0 0.0
    %1678 = vmatprep.mubr.f32.mxu0 0.0
    %v1679 = vand.u32 %v341, 4294901760
    %1680 = vmatmul.mubr.f32.gmra.mxu0 %v1679
    %v1681 = vpop.f32.mrf.mxu0
    %v1682 = vadd.f32 %v1547, %v1681
    %v1683 = vpop.f32.mrf.mxu0
    %v1684 = vadd.f32 %v1549, %v1683
    %1685 = vmatprep.mubr.f32.mxu0 0.0
    %v1686 = vand.u32 %v344, 4294901760
    %1687 = vmatmul.mubr.f32.gmra.mxu0 %v1686
    %v1688 = vpop.f32.mrf.mxu0
    %v1689 = vadd.f32 %v1556, %v1688
    %v1690 = vpop.f32.mrf.mxu0
    %v1691 = vadd.f32 %v1558, %v1690
    %1692 = vdwg.mxu0
    %1693 = vmatprep.subr.mxu0 0.0
    %1694 = vmatpush1.msra.mxu0 0.0
    %1695 = vmatprep.subr.mxu0 0.0
    %1696 = vmatpush1.msra.mxu0 0.0
    %1697 = vmatprep.subr.mxu0 0.0
    %1698 = vmatpush1.msra.mxu0 0.0
    %1699 = vmatprep.subr.mxu0 0.0
    %1700 = vmatpush1.msra.mxu0 0.0
    %1701 = vmatprep.subr.mxu0 0.0
    %1702 = vmatpush1.msra.mxu0 0.0
    %1703 = vmatprep.subr.mxu0 0.0
    %1704 = vmatpush1.msra.mxu0 0.0
    %1705 = vmatprep.subr.mxu0 0.0
    %1706 = vmatpush1.msra.mxu0 0.0
    %v1707 = vand.u32 %v336, 4294901760
    %1708 = vmatprep.subr.mxu0 %v1707
    %v1709 = vand.u32 %v335, 4294901760
    %1710 = vmatpush1.msra.mxu0 %v1709
    %v1711 = vand.u32 %v303, 4294901760
    %1712 = vmatprep.subr.mxu0 %v1711
    %v1713 = vand.u32 %v302, 4294901760
    %1714 = vmatpush1.msra.mxu0 %v1713
    %v1715 = vand.u32 %v270, 4294901760
    %1716 = vmatprep.subr.mxu0 %v1715
    %v1717 = vand.u32 %v269, 4294901760
    %1718 = vmatpush1.msra.mxu0 %v1717
    %v1719 = vand.u32 %v237, 4294901760
    %1720 = vmatprep.subr.mxu0 %v1719
    %v1721 = vand.u32 %v236, 4294901760
    %1722 = vmatpush1.msra.mxu0 %v1721
    %v1723 = vand.u32 %v62, 4294901760
    %1724 = vmatprep.subr.mxu0 %v1723
    %v1725 = vand.u32 %v61, 4294901760
    %1726 = vmatpush1.msra.mxu0 %v1725
    %v1727 = vand.u32 %v204, 4294901760
    %1728 = vmatprep.subr.mxu0 %v1727
    %v1729 = vand.u32 %v203, 4294901760
    %1730 = vmatpush1.msra.mxu0 %v1729
    %v1731 = vand.u32 %v171, 4294901760
    %1732 = vmatprep.subr.mxu0 %v1731
    %v1733 = vand.u32 %v170, 4294901760
    %1734 = vmatpush1.msra.mxu0 %v1733
    %v1735 = vand.u32 %v138, 4294901760
    %1736 = vmatprep.subr.mxu0 %v1735
    %v1737 = vand.u32 %v137, 4294901760
    %1738 = vmatpush1.msra.mxu0 %v1737
    %v1739 = vand.u32 %v105, 4294901760
    %1740 = vmatprep.subr.mxu0 %v1739
    %v1741 = vand.u32 %v104, 4294901760
    %1742 = vmatpush1.msra.mxu0 %v1741
    %1743 = vmatprep.subr.mxu0 0.0
    %1744 = vmatpush2.msra.mxu0 0.0
    %1745 = vmatprep.subr.mxu0 0.0
    %1746 = vmatpush2.msra.mxu0 0.0
    %1747 = vmatprep.subr.mxu0 0.0
    %1748 = vmatpush2.msra.mxu0 0.0
    %1749 = vmatprep.subr.mxu0 0.0
    %1750 = vmatpush2.msra.mxu0 0.0
    %1751 = vmatprep.subr.mxu0 0.0
    %1752 = vmatpush2.msra.mxu0 0.0
    %1753 = vmatprep.subr.mxu0 0.0
    %1754 = vmatpush2.msra.mxu0 0.0
    %1755 = vmatprep.subr.mxu0 0.0
    %1756 = vmatpush2.msra.mxu0 0.0
    %1757 = vmatprep.subr.mxu0 0.0
    %1758 = vmatpush2.msra.mxu0 0.0
    %1759 = vmatprep.subr.mxu0 0.0
    %1760 = vmatpush2.msra.mxu0 0.0
    %1761 = vmatprep.subr.mxu0 0.0
    %1762 = vmatpush2.msra.mxu0 0.0
    %1763 = vmatprep.subr.mxu0 0.0
    %1764 = vmatpush2.msra.mxu0 0.0
    %1765 = vmatprep.subr.mxu0 0.0
    %1766 = vmatpush2.msra.mxu0 0.0
    %1767 = vmatprep.subr.mxu0 0.0
    %1768 = vmatpush2.msra.mxu0 0.0
    %1769 = vmatprep.subr.mxu0 0.0
    %1770 = vmatpush2.msra.mxu0 0.0
    %1771 = vmatprep.subr.mxu0 0.0
    %1772 = vmatpush2.msra.mxu0 0.0
    %1773 = vmatprep.subr.mxu0 0.0
    %1774 = vmatpush2.msra.mxu0 0.0
    %1775 = vmatprep.mubr.f32.mxu0 0.0
    %v1776 = vand.u32 %v341, 4294901760
    %1777 = vmatmul.mubr.f32.gmra.mxu0 %v1776
    %v1778 = vpop.f32.mrf.mxu0
    %v1779 = vadd.f32 %v1682, %v1778
    %v1780 = vpop.f32.mrf.mxu0
    %v1781 = vadd.f32 %v1684, %v1780
    %1782 = vmatprep.mubr.f32.mxu0 0.0
    %v1783 = vand.u32 %v344, 4294901760
    %1784 = vmatmul.mubr.f32.gmra.mxu0 %v1783
    %v1785 = vpop.f32.mrf.mxu0
    %v1786 = vadd.f32 %v1689, %v1785
    %v1787 = vpop.f32.mrf.mxu0
    %v1788 = vadd.f32 %v1691, %v1787
    %1789 = vdwg.mxu0
    %1790 = vst [vmem:[#allocation8] sm:$0xff] %v1057
    %1791 = vst [vmem:[#allocation8 + $0x8] sm:$0xff] %v1059
    %1792 = vst [vmem:[#allocation8 + $0x10] sm:$0xff] %v1779
    %1793 = vst [vmem:[#allocation8 + $0x18] sm:$0xff] %v1781
    %1794 = vst [vmem:[#allocation9] sm:$0xff] %v1064
    %1795 = vst [vmem:[#allocation9 + $0x8] sm:$0xff] %v1066
    %1796 = vst [vmem:[#allocation9 + $0x10] sm:$0xff] %v1786
    %1797 = vst [vmem:[#allocation9 + $0x18] sm:$0xff] %v1788
    %v1798 = vadd.f32 %v1057, %v1059
    %v1799 = vadd.f32 %v1798, %v1779
    %v1800 = vadd.f32 %v1799, %v1781
    %1801 = vadd.xlane.f32.xlu0 %v1800
    %v1802 = vpop.xlane.xlu0 %1801
    %v1803 = vadd.f32 %v1064, %v1066
    %v1804 = vadd.f32 %v1803, %v1786
    %v1805 = vadd.f32 %v1804, %v1788
    %1806 = vadd.xlane.f32.xlu0 %v1805
    %v1807 = vpop.xlane.xlu0 %1806
    %vm1808 = vcmask 7168
    %1809 = vst.msk [vmem:[%s5] sm:$0xff] %vm1808, %v1802
    %1810 = vst.msk [vmem:[%s5 + $0x8] sm:$0xff] %vm1808, %v1807
    %v1811 = vmul.f32 %v1057, %v1057
    %v1812 = vmul.f32 %v1059, %v1059
    %v1813 = vmul.f32 %v1779, %v1779
    %v1814 = vmul.f32 %v1781, %v1781
    %v1815 = vmul.f32 %v1064, %v1064
    %v1816 = vmul.f32 %v1066, %v1066
    %v1817 = vmul.f32 %v1786, %v1786
    %v1818 = vmul.f32 %v1788, %v1788
    %v1819 = vadd.f32 %v1811, %v1812
    %v1820 = vadd.f32 %v1819, %v1813
    %v1821 = vadd.f32 %v1820, %v1814
    %1822 = vadd.xlane.f32.xlu0 %v1821
    %v1823 = vpop.xlane.xlu0 %1822
    %v1824 = vadd.f32 %v1815, %v1816
    %v1825 = vadd.f32 %v1824, %v1817
    %v1826 = vadd.f32 %v1825, %v1818
    %1827 = vadd.xlane.f32.xlu0 %v1826
    %v1828 = vpop.xlane.xlu0 %1827
    %1829 = vst.msk [vmem:[%s6] sm:$0xff] %vm1808, %v1823
    %1830 = vst.msk [vmem:[%s6 + $0x8] sm:$0xff] %vm1808, %v1828
    // Predicated region
    $region26: #{tpu_custom_call.1} parent=1 // pred_check
      _
    $region27: #{tpu_custom_call.1} parent=1 // pred_check_branch
      %1832 = sbr.rel (0) target = $region29
    $region28: #{tpu_custom_call.1} parent=1 // pred_region
      %s1834 = ssub.s32 512, 512
      %1835 = vsyncadd [#allocation4], %s1834
      %s1837 = sshll.u32 [#allocation8], 4
      %s1838 = int_to_ptr.vmem [resolvable:$true] %s1837
      %1840 = dma.vmem_to_hbm [thread:$0]  %s1838, 512, %s3, [#allocation4]
    $region29: #{tpu_custom_call.1} parent=1 // pred_fallthru
      _
    // Predicated region
    $region30: #{tpu_custom_call.1} parent=1 // pred_check
      _
    $region31: #{tpu_custom_call.1} parent=1 // pred_check_branch
      %1842 = sbr.rel (0) target = $region33
    $region32: #{tpu_custom_call.1} parent=1 // pred_region
      %s1844 = ssub.s32 512, 512
      %1845 = vsyncadd [#allocation10], %s1844
      %s1847 = sshll.u32 [#allocation9], 4
      %s1848 = int_to_ptr.vmem [resolvable:$true] %s1847
      %1850 = dma.vmem_to_hbm [thread:$0]  %s1848, 512, %s4, [#allocation10]
    $region33: #{tpu_custom_call.1} parent=1 // pred_fallthru
      _
    // Predicated region
    $region34: #{tpu_custom_call.1} parent=1 // pred_check
      _
    $region35: #{tpu_custom_call.1} parent=1 // pred_check_branch
      %1852 = sbr.rel (0) target = $region37
    $region36: #{tpu_custom_call.1} parent=1 // pred_region
      _
    $region37: #{tpu_custom_call.1} parent=1 // pred_fallthru
      _
    // Predicated region
    $region38: #{tpu_custom_call.1} parent=1 // pred_check
      _
    $region39: #{tpu_custom_call.1} parent=1 // pred_check_branch
      %1854 = sbr.rel (0) target = $region41
    $region40: #{tpu_custom_call.1} parent=1 // pred_region
      _
    $region41: #{tpu_custom_call.1} parent=1 // pred_fallthru
      _
    // Predicated region
    $region42: #{tpu_custom_call.1} parent=1 // pred_check
      _
    $region43: #{tpu_custom_call.1} parent=1 // pred_check_branch
      %1856 = sbr.rel (0) target = $region45
    $region44: #{tpu_custom_call.1} parent=1 // pred_region
      %1857 = dma.done [#allocation4], 512
    $region45: #{tpu_custom_call.1} parent=1 // pred_fallthru
      _
    // Predicated region
    $region46: #{tpu_custom_call.1} parent=1 // pred_check
      _
    $region47: #{tpu_custom_call.1} parent=1 // pred_check_branch
      %1859 = sbr.rel (0) target = $region49
    $region48: #{tpu_custom_call.1} parent=1 // pred_region
      %1860 = dma.done [#allocation10], 512
    $region49: #{tpu_custom_call.1} parent=1 // pred_fallthru
      _
    // Predicated region
    $region50: #{tpu_custom_call.1} parent=1 // pred_check
      _
    $region51: #{tpu_custom_call.1} parent=1 // pred_check_branch
      %1862 = sbr.rel (0) target = $region53
    $region52: #{tpu_custom_call.1} parent=1 // pred_region
      _
    $region53: #{tpu_custom_call.1} parent=1 // pred_fallthru
      _
    // Predicated region
    $region54: #{tpu_custom_call.1} parent=1 // pred_check
      _
    $region55: #{tpu_custom_call.1} parent=1 // pred_check_branch
      %1864 = sbr.rel (0) target = $region57
    $region56: #{tpu_custom_call.1} parent=1 // pred_region
      _
    $region57: #{tpu_custom_call.1} parent=1 // pred_fallthru
      _
    %1865 = vsyncpa [#allocation3], 1
    %1866 = vsyncpa [#allocation6], 1
    %1867 = vsyncpa [#allocation4], 1
    %1868 = vsyncpa [#allocation10], 1

</llo_original>
